<compile_context>
chip_gen: v7x
topology: tpu7x:2x2x1
jax: 0.10.0
libtpu: 0.0.40
codegen_flags: <defaults>
</compile_context>

<pallas_src>
import functools

import jax
import jax.numpy as jnp
import numpy as np
from jax.experimental import pallas as pl
from jax.experimental.pallas import tpu as pltpu


# --------------------------------------------------------------------------
# Kernel
# --------------------------------------------------------------------------
def _basic_block_kernel(x_ref, w1_ref, s1_ref, b1_ref, w2_ref, s2_ref, b2_ref,
                        o_ref, taps_ref, *, img_h):
    # x_ref   : (Mb, WC)      f32   Mb = Nb*img_h rows, lane index = w*C + c
    # w*_ref  : (3*WC, WC)    bf16  block-banded 3x3 conv weights (unscaled)
    # s*_ref  : (1, WC)       f32   folded BN scale, tiled over w
    # b*_ref  : (1, WC)       f32   folded BN bias,  tiled over w
    # o_ref   : (Mb, WC)      f32
    # taps_ref: (Mb, 3*WC)    bf16  persistent MXU-operand scratch
    mb, wc = o_ref.shape
    nb = mb // img_h

    x = x_ref[...]                                   # (Mb, WC) f32; residual too

    # Per-image top/bottom border masks for the dh=-1 / dh=+1 taps (constant
    # per step; shared by both convs).
    h_in = jnp.reshape(
        jax.lax.broadcasted_iota(jnp.int32, (nb, img_h, wc), 1), (mb, wc))
    not_top = h_in != 0                              # row h-1 exists
    not_bot = h_in != (img_h - 1)                    # row h+1 exists

    def conv3x3(slab, w_ref):
        # slab: (Mb, WC) f32 -> (Mb, WC) f32 = SAME-padded 3x3 conv.
        up = jnp.where(not_top, pltpu.roll(slab, shift=1, axis=0), 0.0)
        dn = jnp.where(not_bot, pltpu.roll(slab, shift=mb - 1, axis=0), 0.0)
        # 128-aligned lane-block stores into the bf16 taps scratch.
        taps_ref[:, 0 * wc:1 * wc] = up.astype(jnp.bfloat16)    # dh = -1
        taps_ref[:, 1 * wc:2 * wc] = slab.astype(jnp.bfloat16)  # dh =  0
        taps_ref[:, 2 * wc:3 * wc] = dn.astype(jnp.bfloat16)    # dh = +1
        return jnp.dot(taps_ref[...], w_ref[...],
                       preferred_element_type=jnp.float32)

    # conv1 -> bn1 (f32 scale/bias) -> relu
    out1 = jnp.maximum(conv3x3(x, w1_ref) * s1_ref[...] + b1_ref[...], 0.0)
    # conv2 -> bn2 (f32 scale/bias)
    out2 = conv3x3(out1, w2_ref) * s2_ref[...] + b2_ref[...]
    # + residual, relu
    o_ref[...] = jnp.maximum(out2 + x, 0.0).astype(o_ref.dtype)


# --------------------------------------------------------------------------
# Wrapper
# --------------------------------------------------------------------------
def _choose_nb(n, h, target_rows):
    """Images per grid step: target ~target_rows matmul rows, keep >=2 steps."""
    nb = max(1, min(n, target_rows // max(h, 1)))
    while n % nb:
        nb -= 1
    if n // nb < 2 and n >= 2:       # keep >=2 grid steps (v7x megacore / pipelining)
        nb = max(1, nb // 2)
        while n % nb:
            nb -= 1
    return nb


def basic_block_pallas(x_nhwc, w1, s1, b1, w2, s2, b2, *, target_rows=256):
    """x_nhwc: (N,H,W,C) f32.  w*: (3*W*C, W*C) bf16.  s*, b*: (1, W*C) f32."""
    N, H, W, C = x_nhwc.shape
    WC = W * C
    assert WC % 128 == 0, "lane-dense layout requires W*C to be a multiple of 128"
    assert w1.shape == (3 * WC, WC) and w2.shape == (3 * WC, WC)
    assert s1.shape == (1, WC) and b1.shape == (1, WC)
    assert s2.shape == (1, WC) and b2.shape == (1, WC)

    nb = _choose_nb(N, H, target_rows)
    mb = nb * H
    assert mb % 8 == 0, "Nb*H must be a multiple of 8 (sublane tiling)"
    grid = (N // nb,)
    total_rows = N * H

    x_rows = x_nhwc.reshape(total_rows, WC)          # free reshape: lanes = w*C + c

    # Cost hint (two convs = two (M, 3WC)x(3WC, WC) matmuls over all rows).
    flops = 2 * 2 * total_rows * (3 * WC) * WC
    bytes_accessed = (2 * total_rows * WC * 4        # x in + out (f32)
                      + 2 * 3 * WC * WC * 2          # two bf16 banded weights
                      + 4 * WC * 4)                  # scales + biases
    cost = pl.CostEstimate(flops=flops, transcendentals=0,
                           bytes_accessed=bytes_accessed)

    # VMEM footprint: double-buffered x/out blocks + resident weights + scratch.
    vmem_bytes = (2 * 2 * mb * WC * 4
                  + 2 * 3 * WC * WC * 2
                  + 4 * 8 * WC * 4
                  + mb * 3 * WC * 2)
    vmem_limit = int(min(max(2 * vmem_bytes, 16 * 1024 * 1024),
                         56 * 1024 * 1024))

    out = pl.pallas_call(
        functools.partial(_basic_block_kernel, img_h=H),
        out_shape=jax.ShapeDtypeStruct((total_rows, WC), x_nhwc.dtype),
        grid_spec=pltpu.PrefetchScalarGridSpec(
            num_scalar_prefetch=0,
            grid=grid,
            in_specs=[
                pl.BlockSpec((mb, WC), lambda i: (i, 0)),        # x (also residual)
                pl.BlockSpec((3 * WC, WC), lambda i: (0, 0)),    # banded w1 (bf16)
                pl.BlockSpec((1, WC), lambda i: (0, 0)),         # bn1 scale
                pl.BlockSpec((1, WC), lambda i: (0, 0)),         # bn1 bias
                pl.BlockSpec((3 * WC, WC), lambda i: (0, 0)),    # banded w2 (bf16)
                pl.BlockSpec((1, WC), lambda i: (0, 0)),         # bn2 scale
                pl.BlockSpec((1, WC), lambda i: (0, 0)),         # bn2 bias
            ],
            out_specs=pl.BlockSpec((mb, WC), lambda i: (i, 0)),
            scratch_shapes=[pltpu.VMEM((mb, 3 * WC), jnp.bfloat16)],
        ),
        compiler_params=pltpu.CompilerParams(
            dimension_semantics=("parallel",),       # row blocks split across cores
            vmem_limit_bytes=vmem_limit,
        ),
        cost_estimate=cost,
    )(x_rows, w1, s1, b1, w2, s2, b2)

    return out.reshape(N, H, W, C)


# --------------------------------------------------------------------------
# Host-side parameter preparation (BN folding + block-banded weights)
# --------------------------------------------------------------------------
def _fold_bn(gamma, beta, mean, var, eps):
    scale = gamma / jnp.sqrt(var + eps)
    bias = beta - mean * scale
    return scale, bias


def _build_banded_weight(w_oihw, W):
    """(C,C,3,3) OIHW f32 conv weight -> (3*W*C, W*C) bf16 block-banded matrix.

    banded[(kh*W + wi)*C + ci, wo*C + co] = w_hwio[kh, wi - wo + 1, ci, co]
    when |wi - wo| <= 1, else 0.  Right-multiplying the (M, 3*W*C) stack of
    dh-shifted slabs by this matrix computes the SAME-padded 3x3 conv.
    """
    w_np = np.asarray(w_oihw, np.float32)
    C = w_np.shape[0]
    assert w_np.shape == (C, C, 3, 3), "BasicBlock requires inplanes==planes, 3x3 conv"
    w_hwio = np.transpose(w_np, (2, 3, 1, 0))                     # (3,3,Cin,Cout)
    banded = np.zeros((3, W, C, W, C), np.float32)
    for kh in range(3):
        for wo in range(W):
            for kw in range(3):
                wi = wo + kw - 1
                if 0 <= wi < W:
                    banded[kh, wi, :, wo, :] = w_hwio[kh, kw]
    return jnp.asarray(banded.reshape(3 * W * C, W * C), jnp.bfloat16)


def prepare_block_params(w_oihw, gamma, beta, mean, var, W, eps=1e-5):
    """Eval-mode BN -> (scale, bias); weights -> bf16 banded mats; tile to W*C."""
    scale, bias = _fold_bn(gamma, beta, mean, var, eps)
    C = w_oihw.shape[0]
    w_banded = _build_banded_weight(w_oihw, W)
    s_slab = jnp.tile(scale, W).reshape(1, W * C).astype(jnp.float32)
    b_slab = jnp.tile(bias, W).reshape(1, W * C).astype(jnp.float32)
    return w_banded, s_slab, b_slab, scale, bias


# --------------------------------------------------------------------------
# Pure-JAX reference (bf16 MXU operands, f32 accumulate, f32 BN epilogue)
# --------------------------------------------------------------------------
def basic_block_ref(x_nhwc, w1_oihw, s1, b1, w2_oihw, s2, b2):
    def conv(x, w_oihw):
        w_hwio = jnp.transpose(w_oihw, (2, 3, 1, 0)).astype(jnp.bfloat16)
        return jax.lax.conv_general_dilated(
            x.astype(jnp.bfloat16), w_hwio, window_strides=(1, 1), padding="SAME",
            dimension_numbers=("NHWC", "HWIO", "NHWC"),
            preferred_element_type=jnp.float32)
    o1 = jnp.maximum(conv(x_nhwc, w1_oihw) * s1 + b1, 0.0)
    o2 = conv(o1, w2_oihw) * s2 + b2
    return jnp.maximum(o2 + x_nhwc, 0.0)


# --------------------------------------------------------------------------
if __name__ == "__main__":
    # BasicBlock(inplanes=8, planes=8, stride=1, downsample=None)
    N, C, H, W = 32, 8, 16, 16            # W*C = 128 -> one lane tile; M=256/step
    key = jax.random.PRNGKey(0)
    ks = jax.random.split(key, 8)

    x_nchw = jax.random.normal(ks[0], (N, C, H, W), jnp.float32)

    # conv3x3 weights in PyTorch OIHW layout (bias=False)
    w1_oihw = 0.1 * jax.random.normal(ks[1], (C, C, 3, 3), jnp.float32)
    w2_oihw = 0.1 * jax.random.normal(ks[2], (C, C, 3, 3), jnp.float32)

    # eval-mode BatchNorm params (bn2 is the "last_bn": zero-init beta)
    eps = 1e-5
    g1 = 1.0 + 0.1 * jax.random.normal(ks[3], (C,), jnp.float32)
    be1 = 0.1 * jax.random.normal(ks[4], (C,), jnp.float32)
    mu1 = 0.1 * jax.random.normal(ks[5], (C,), jnp.float32)
    var1 = jnp.abs(1.0 + 0.1 * jax.random.normal(ks[6], (C,), jnp.float32))
    g2 = 1.0 + 0.1 * jax.random.normal(ks[7], (C,), jnp.float32)
    be2 = jnp.zeros((C,), jnp.float32)
    mu2 = jnp.zeros((C,), jnp.float32)
    var2 = jnp.ones((C,), jnp.float32)

    w1_banded, s1_slab, b1_slab, s1_vec, b1_vec = prepare_block_params(
        w1_oihw, g1, be1, mu1, var1, W, eps)
    w2_banded, s2_slab, b2_slab, s2_vec, b2_vec = prepare_block_params(
        w2_oihw, g2, be2, mu2, var2, W, eps)

    # layout: NCHW (PyTorch) -> NHWC, packed as (N*H, W*C) inside the wrapper
    x_nhwc = jnp.transpose(x_nchw, (0, 2, 3, 1))

    out = basic_block_pallas(x_nhwc, w1_banded, s1_slab, b1_slab,
                             w2_banded, s2_slab, b2_slab)
    out = jax.block_until_ready(out)

    ref = basic_block_ref(x_nhwc, w1_oihw, s1_vec, b1_vec, w2_oihw, s2_vec, b2_vec)
    np.testing.assert_allclose(np.asarray(out), np.asarray(ref),
                               rtol=1e-2, atol=1e-2)

    _ = jnp.transpose(out, (0, 3, 1, 2))   # back to NCHW for a PyTorch caller
    print("KERNEL_OK")
</pallas_src>

<mosaic_0001>
module attributes {stable_mosaic.version = 11 : i64} {
  func.func @_basic_block_kernel(%arg0: i32, %arg1: memref<256x128xf32, #tpu.memory_space<vmem>>, %arg2: memref<384x128xbf16, #tpu.memory_space<vmem>>, %arg3: memref<1x128xf32, #tpu.memory_space<vmem>>, %arg4: memref<1x128xf32, #tpu.memory_space<vmem>>, %arg5: memref<384x128xbf16, #tpu.memory_space<vmem>>, %arg6: memref<1x128xf32, #tpu.memory_space<vmem>>, %arg7: memref<1x128xf32, #tpu.memory_space<vmem>>, %arg8: memref<256x128xf32, #tpu.memory_space<vmem>>, %arg9: memref<256x384xbf16, #tpu.memory_space<vmem>>) attributes {dimension_semantics = [#tpu.dimension_semantics<parallel>], iteration_bounds = array<i64: 2>, scalar_prefetch = 0 : i64, scratch_operands = 1 : i64, tpu.core_type = #tpu.core_type<tc>, window_params = [{transform_indices = @transform_0, window_bounds = array<i64: 256, 128>}, {pipeline_mode = #tpu.pipeline_mode<synchronous>, transform_indices = @transform_1, window_bounds = array<i64: 384, 128>}, {pipeline_mode = #tpu.pipeline_mode<synchronous>, transform_indices = @transform_2, window_bounds = array<i64: 1, 128>}, {pipeline_mode = #tpu.pipeline_mode<synchronous>, transform_indices = @transform_3, window_bounds = array<i64: 1, 128>}, {pipeline_mode = #tpu.pipeline_mode<synchronous>, transform_indices = @transform_4, window_bounds = array<i64: 384, 128>}, {pipeline_mode = #tpu.pipeline_mode<synchronous>, transform_indices = @transform_5, window_bounds = array<i64: 1, 128>}, {pipeline_mode = #tpu.pipeline_mode<synchronous>, transform_indices = @transform_6, window_bounds = array<i64: 1, 128>}, {transform_indices = @transform_7, window_bounds = array<i64: 256, 128>}]} {
    %c0 = arith.constant 0 : index
    %c0_0 = arith.constant 0 : index
    %0 = vector.load %arg1[%c0, %c0_0] : memref<256x128xf32, #tpu.memory_space<vmem>>, vector<256x128xf32>
    %1 = tpu.iota {dimensions = array<i32: 1>} : vector<16x16x128xi32>
    %2 = vector.shape_cast %1 : vector<16x16x128xi32> to vector<256x128xi32>
    %c0_i32 = arith.constant 0 : i32
    %3 = vector.broadcast %c0_i32 : i32 to vector<256x128xi32>
    %4 = arith.cmpi ne, %2, %3 : vector<256x128xi32>
    %c15_i32 = arith.constant 15 : i32
    %5 = vector.broadcast %c15_i32 : i32 to vector<256x128xi32>
    %6 = arith.cmpi ne, %2, %5 : vector<256x128xi32>
    %c1_i32 = arith.constant 1 : i32
    %7 = tpu.dynamic_rotate %0 by %c1_i32 dim 0 : vector<256x128xf32>, i32 -> vector<256x128xf32>
    %cst = arith.constant 0.000000e+00 : f32
    %8 = vector.broadcast %cst : f32 to vector<256x128xf32>
    %9 = arith.select %4, %7, %8 : vector<256x128xi1>, vector<256x128xf32>
    %c255_i32 = arith.constant 255 : i32
    %10 = tpu.dynamic_rotate %0 by %c255_i32 dim 0 : vector<256x128xf32>, i32 -> vector<256x128xf32>
    %cst_1 = arith.constant 0.000000e+00 : f32
    %11 = vector.broadcast %cst_1 : f32 to vector<256x128xf32>
    %12 = arith.select %6, %10, %11 : vector<256x128xi1>, vector<256x128xf32>
    %13 = arith.truncf %9 : vector<256x128xf32> to vector<256x128xbf16>
    %c0_2 = arith.constant 0 : index
    %c0_3 = arith.constant 0 : index
    %14 = vector.load %arg9[%c0_2, %c0_3] : memref<256x384xbf16, #tpu.memory_space<vmem>>, vector<256x128xbf16>
    tpu.vector_store %arg9[%c0_2, %c0_3], %13 {strides = array<i32>} : memref<256x384xbf16, #tpu.memory_space<vmem>>, vector<256x128xbf16>,
    %15 = arith.truncf %0 : vector<256x128xf32> to vector<256x128xbf16>
    %c0_4 = arith.constant 0 : index
    %c128 = arith.constant 128 : index
    %16 = vector.load %arg9[%c0_4, %c128] : memref<256x384xbf16, #tpu.memory_space<vmem>>, vector<256x128xbf16>
    tpu.vector_store %arg9[%c0_4, %c128], %15 {strides = array<i32>} : memref<256x384xbf16, #tpu.memory_space<vmem>>, vector<256x128xbf16>,
    %17 = arith.truncf %12 : vector<256x128xf32> to vector<256x128xbf16>
    %c0_5 = arith.constant 0 : index
    %c256 = arith.constant 256 : index
    %18 = vector.load %arg9[%c0_5, %c256] : memref<256x384xbf16, #tpu.memory_space<vmem>>, vector<256x128xbf16>
    tpu.vector_store %arg9[%c0_5, %c256], %17 {strides = array<i32>} : memref<256x384xbf16, #tpu.memory_space<vmem>>, vector<256x128xbf16>,
    %c0_6 = arith.constant 0 : index
    %c0_7 = arith.constant 0 : index
    %19 = vector.load %arg9[%c0_6, %c0_7] : memref<256x384xbf16, #tpu.memory_space<vmem>>, vector<256x384xbf16>
    %c0_8 = arith.constant 0 : index
    %c0_9 = arith.constant 0 : index
    %20 = vector.load %arg2[%c0_8, %c0_9] : memref<384x128xbf16, #tpu.memory_space<vmem>>, vector<384x128xbf16>
    %cst_10 = arith.constant dense<0.000000e+00> : vector<256x128xf32>
    %21 = tpu.matmul %19, %20, %cst_10 {dimension_numbers = #tpu.dot_dimension_numbers<[1], [0], [0], [1], [0, 0, 1, 1], [], []>} : vector<256x384xbf16>, vector<384x128xbf16>, vector<256x128xf32> -> vector<256x128xf32>
    %c0_11 = arith.constant 0 : index
    %c0_12 = arith.constant 0 : index
    %22 = vector.load %arg3[%c0_11, %c0_12] : memref<1x128xf32, #tpu.memory_space<vmem>>, vector<1x128xf32>
    %23 = vector.broadcast %22 : vector<1x128xf32> to vector<256x128xf32>
    %24 = arith.mulf %21, %23 : vector<256x128xf32>
    %c0_13 = arith.constant 0 : index
    %c0_14 = arith.constant 0 : index
    %25 = vector.load %arg4[%c0_13, %c0_14] : memref<1x128xf32, #tpu.memory_space<vmem>>, vector<1x128xf32>
    %26 = vector.broadcast %25 : vector<1x128xf32> to vector<256x128xf32>
    %27 = arith.addf %24, %26 : vector<256x128xf32>
    %cst_15 = arith.constant 0.000000e+00 : f32
    %28 = vector.broadcast %cst_15 : f32 to vector<256x128xf32>
    %29 = arith.maximumf %27, %28 : vector<256x128xf32>
    %c1_i32_16 = arith.constant 1 : i32
    %30 = tpu.dynamic_rotate %29 by %c1_i32_16 dim 0 : vector<256x128xf32>, i32 -> vector<256x128xf32>
    %cst_17 = arith.constant 0.000000e+00 : f32
    %31 = vector.broadcast %cst_17 : f32 to vector<256x128xf32>
    %32 = arith.select %4, %30, %31 : vector<256x128xi1>, vector<256x128xf32>
    %c255_i32_18 = arith.constant 255 : i32
    %33 = tpu.dynamic_rotate %29 by %c255_i32_18 dim 0 : vector<256x128xf32>, i32 -> vector<256x128xf32>
    %cst_19 = arith.constant 0.000000e+00 : f32
    %34 = vector.broadcast %cst_19 : f32 to vector<256x128xf32>
    %35 = arith.select %6, %33, %34 : vector<256x128xi1>, vector<256x128xf32>
    %36 = arith.truncf %32 : vector<256x128xf32> to vector<256x128xbf16>
    %c0_20 = arith.constant 0 : index
    %c0_21 = arith.constant 0 : index
    %37 = vector.load %arg9[%c0_20, %c0_21] : memref<256x384xbf16, #tpu.memory_space<vmem>>, vector<256x128xbf16>
    tpu.vector_store %arg9[%c0_20, %c0_21], %36 {strides = array<i32>} : memref<256x384xbf16, #tpu.memory_space<vmem>>, vector<256x128xbf16>,
    %38 = arith.truncf %29 : vector<256x128xf32> to vector<256x128xbf16>
    %c0_22 = arith.constant 0 : index
    %c128_23 = arith.constant 128 : index
    %39 = vector.load %arg9[%c0_22, %c128_23] : memref<256x384xbf16, #tpu.memory_space<vmem>>, vector<256x128xbf16>
    tpu.vector_store %arg9[%c0_22, %c128_23], %38 {strides = array<i32>} : memref<256x384xbf16, #tpu.memory_space<vmem>>, vector<256x128xbf16>,
    %40 = arith.truncf %35 : vector<256x128xf32> to vector<256x128xbf16>
    %c0_24 = arith.constant 0 : index
    %c256_25 = arith.constant 256 : index
    %41 = vector.load %arg9[%c0_24, %c256_25] : memref<256x384xbf16, #tpu.memory_space<vmem>>, vector<256x128xbf16>
    tpu.vector_store %arg9[%c0_24, %c256_25], %40 {strides = array<i32>} : memref<256x384xbf16, #tpu.memory_space<vmem>>, vector<256x128xbf16>,
    %c0_26 = arith.constant 0 : index
    %c0_27 = arith.constant 0 : index
    %42 = vector.load %arg9[%c0_26, %c0_27] : memref<256x384xbf16, #tpu.memory_space<vmem>>, vector<256x384xbf16>
    %c0_28 = arith.constant 0 : index
    %c0_29 = arith.constant 0 : index
    %43 = vector.load %arg5[%c0_28, %c0_29] : memref<384x128xbf16, #tpu.memory_space<vmem>>, vector<384x128xbf16>
    %cst_30 = arith.constant dense<0.000000e+00> : vector<256x128xf32>
    %44 = tpu.matmul %42, %43, %cst_30 {dimension_numbers = #tpu.dot_dimension_numbers<[1], [0], [0], [1], [0, 0, 1, 1], [], []>} : vector<256x384xbf16>, vector<384x128xbf16>, vector<256x128xf32> -> vector<256x128xf32>
    %c0_31 = arith.constant 0 : index
    %c0_32 = arith.constant 0 : index
    %45 = vector.load %arg6[%c0_31, %c0_32] : memref<1x128xf32, #tpu.memory_space<vmem>>, vector<1x128xf32>
    %46 = vector.broadcast %45 : vector<1x128xf32> to vector<256x128xf32>
    %47 = arith.mulf %44, %46 : vector<256x128xf32>
    %c0_33 = arith.constant 0 : index
    %c0_34 = arith.constant 0 : index
    %48 = vector.load %arg7[%c0_33, %c0_34] : memref<1x128xf32, #tpu.memory_space<vmem>>, vector<1x128xf32>
    %49 = vector.broadcast %48 : vector<1x128xf32> to vector<256x128xf32>
    %50 = arith.addf %47, %49 : vector<256x128xf32>
    %51 = arith.addf %50, %0 : vector<256x128xf32>
    %cst_35 = arith.constant 0.000000e+00 : f32
    %52 = vector.broadcast %cst_35 : f32 to vector<256x128xf32>
    %53 = arith.maximumf %51, %52 : vector<256x128xf32>
    %c0_36 = arith.constant 0 : index
    %c0_37 = arith.constant 0 : index
    %54 = vector.load %arg8[%c0_36, %c0_37] : memref<256x128xf32, #tpu.memory_space<vmem>>, vector<256x128xf32>
    tpu.vector_store %arg8[%c0_36, %c0_37], %53 {strides = array<i32>} : memref<256x128xf32, #tpu.memory_space<vmem>>, vector<256x128xf32>,
    return
  }
  func.func @transform_0(%arg0: i32) -> (i32, i32) {
    %c0_i32 = arith.constant 0 : i32
    %c0_i32_0 = arith.constant 0 : i32
    return %arg0, %c0_i32 : i32, i32
  }
  func.func @transform_1(%arg0: i32) -> (i32, i32) {
    %c0_i32 = arith.constant 0 : i32
    %c0_i32_0 = arith.constant 0 : i32
    %c0_i32_1 = arith.constant 0 : i32
    return %c0_i32, %c0_i32_0 : i32, i32
  }
  func.func @transform_2(%arg0: i32) -> (i32, i32) {
    %c0_i32 = arith.constant 0 : i32
    %c0_i32_0 = arith.constant 0 : i32
    %c0_i32_1 = arith.constant 0 : i32
    return %c0_i32, %c0_i32_0 : i32, i32
  }
  func.func @transform_3(%arg0: i32) -> (i32, i32) {
    %c0_i32 = arith.constant 0 : i32
    %c0_i32_0 = arith.constant 0 : i32
    %c0_i32_1 = arith.constant 0 : i32
    return %c0_i32, %c0_i32_0 : i32, i32
  }
  func.func @transform_4(%arg0: i32) -> (i32, i32) {
    %c0_i32 = arith.constant 0 : i32
    %c0_i32_0 = arith.constant 0 : i32
    %c0_i32_1 = arith.constant 0 : i32
    return %c0_i32, %c0_i32_0 : i32, i32
  }
  func.func @transform_5(%arg0: i32) -> (i32, i32) {
    %c0_i32 = arith.constant 0 : i32
    %c0_i32_0 = arith.constant 0 : i32
    %c0_i32_1 = arith.constant 0 : i32
    return %c0_i32, %c0_i32_0 : i32, i32
  }
  func.func @transform_6(%arg0: i32) -> (i32, i32) {
    %c0_i32 = arith.constant 0 : i32
    %c0_i32_0 = arith.constant 0 : i32
    %c0_i32_1 = arith.constant 0 : i32
    return %c0_i32, %c0_i32_0 : i32, i32
  }
  func.func @transform_7(%arg0: i32) -> (i32, i32) {
    %c0_i32 = arith.constant 0 : i32
    %c0_i32_0 = arith.constant 0 : i32
    return %arg0, %c0_i32 : i32, i32
  }
}

</mosaic_0001>

<llo_original>
// kernel: tpu_custom_call.1
$region0: #{tpu_custom_call.1}
  #allocation0 [shape = 'u32[]', space=smem, size = 0x4, offset = 0x4, fixed_abs, tag = 'smem constant byte address 0x4 - core index']
  #allocation1 [shape = 'u32[144,128]{1,0:T(1,128)}', space=vmem, size = 0x12000, scoped, tag = 'internal scratch']
  #allocation2 [shape = 'bf16[256,384]{1,0:T(16,128)(2,1)}', space=vmem, size = 0x30000, scoped, tag = 'scratch operand']
  %s0 = inlined_call_operand.hbm [shape: f32[512,128], index: 0, kind: input, shape index: {}]
  %s1 = inlined_call_operand.hbm [shape: bf16[384,128], index: 1, kind: input, shape index: {}]
  %s2 = inlined_call_operand.vmem [shape: f32[1,128], index: 2, kind: input, shape index: {}]
  %s3 = inlined_call_operand.vmem [shape: f32[1,128], index: 3, kind: input, shape index: {}]
  %s4 = inlined_call_operand.hbm [shape: bf16[384,128], index: 4, kind: input, shape index: {}]
  %s5 = inlined_call_operand.vmem [shape: f32[1,128], index: 5, kind: input, shape index: {}]
  %s6 = inlined_call_operand.vmem [shape: f32[1,128], index: 6, kind: input, shape index: {}]
  %s7 = inlined_call_operand.hbm [shape: f32[512,128], index: 7, kind: output, shape index: {}]
  %s8 = sld [smem:[#allocation0]]
  $region73: #{tpu_custom_call.1} parent=0
    _
  %s10 = ssub.s32 1, %s8
  %s11 = scalar_select 0, %s10, %s8
  $region1: #{tpu_custom_call.1} parent=0
    #allocation3 [shape = 'u8[262144]{0}', space=vmem, size = 0x40000, scoped, tag = 'input window, operand 0']
    #allocation4 [shape = 's32[2]{0}', space=sflag, size = 0x8, scoped, tag = 'scoped memory for tpu_custom_call.1']
    #allocation5 [shape = 's32[2]{0}', space=sflag, size = 0x8, scoped, tag = 'scoped memory for tpu_custom_call.1']
    #allocation6 [shape = 'u8[98304]{0}', space=vmem, size = 0x18000, scoped, tag = 'input window, operand 1, single buffered']
    #allocation7 [shape = 's32[1]{0}', space=sflag, size = 0x4, scoped, tag = 'scoped memory for tpu_custom_call.1']
    #allocation8 [shape = 'u8[98304]{0}', space=vmem, size = 0x18000, scoped, tag = 'input window, operand 4, single buffered']
    #allocation9 [shape = 'u8[262144]{0}', space=vmem, size = 0x40000, scoped, tag = 'output window, operand 0']
    %12 = vsyncpa [#allocation4], 0
    %s13 = scalar_lea.sflag [#allocation4], 1
    %14 = vsyncpa %s13, 0
    %15 = vsyncpa [#allocation7], 0
    %16 = vsyncpa [#allocation5], 0
    %s17 = scalar_lea.sflag [#allocation5], 1
    %18 = vsyncpa %s17, 0
    loop: start=0, step=1, limit=4
    $region2: #{tpu_custom_call.1} parent=1 // loop_pre_header
      _
    $region3: #{tpu_custom_call.1} parent=1 // loop_header
      %s20 = sphi 0, %s24
      %p21 = scmp.ge.s32.totalorder %s20, 4
      %s30 = sphi 0, %s32
      %s33 = sphi 0, %s30
      %s34 = sphi 0, %s33
      %s50 = sphi 0, %s34
      %s54 = sphi 0, %s54
      %s56 = sphi 0, %s54
      %s57 = sphi 0, %s56
      %s71 = sphi 0, %s57
      %s75 = sphi 0, %s75
      %s77 = sphi 0, %s75
      %s78 = sphi 0, %s77
      %s92 = sphi 0, %s78
      %s96 = sphi 0, %s96
      %s98 = sphi 0, %s96
      %s99 = sphi 0, %s98
      %s113 = sphi 0, %s99
      %s117 = sphi 0, %s117
      %s119 = sphi 0, %s117
      %s120 = sphi 0, %s119
      %s134 = sphi 0, %s120
      %s138 = sphi 0, %s138
      %s140 = sphi 0, %s138
      %s141 = sphi 0, %s140
      %s155 = sphi 0, %s141
      %s159 = sphi 0, %s159
      %s161 = sphi 0, %s159
      %s162 = sphi 0, %s161
      %s176 = sphi 0, %s162
      %s182 = sphi 0, %s184
      %s185 = sphi 0, %s182
      %s186 = sphi 0, %s185
      %s202 = sphi 0, %s186
    $region4: #{tpu_custom_call.1} parent=1 // loop_header_branch
      %23 = sbr.rel (%p21) target = $region8
    $region5: #{tpu_custom_call.1} parent=1 // loop_body
      %s25 = ssub.s32 %s20, 1
      %s26 = ssub.s32 %s20, 2
      %s27 = sadd.s32 %s20, 1
      %s28 = ssub.s32 %s20, %s27
      %p29 = scmp.eq.s32.totalorder %s28, 0
      %s31 = sadd.s32 %s30, 1
      %s32 = scalar_select %p29, %s30, %s31
      %p35 = pneg %p29
      %p36 = scmp.eq.s32.totalorder %s20, 1
      %p37 = por %p35, %p36
      %p38 = scmp.ne.s32.totalorder %s30, %s33
      %p39 = scmp.eq.s32.totalorder %s20, 0
      %p40 = por %p38, %p39
      %p41 = scmp.ne.s32.totalorder %s30, %s33
      %p42 = scmp.eq.s32.totalorder %s25, 1
      %p43 = por %p41, %p42
      %p44 = scmp.ne.s32.totalorder %s33, %s34
      %p45 = scmp.eq.s32.totalorder %s25, 0
      %p46 = por %p44, %p45
      %p47 = scmp.ne.s32.totalorder %s33, %s34
      %p48 = scmp.eq.s32.totalorder %s26, 1
      %p49 = por %p47, %p48
      %p51 = scmp.ne.s32.totalorder %s34, %s50
      %p52 = scmp.eq.s32.totalorder %s26, 0
      %p53 = por %p51, %p52
      %s55 = sadd.s32 %s54, 1
      %p58 = scmp.eq.s32.totalorder %s20, 1
      %p59 = scmp.ne.s32.totalorder %s54, %s56
      %p60 = scmp.eq.s32.totalorder %s20, 0
      %p61 = por %p59, %p60
      %p62 = scmp.ne.s32.totalorder %s54, %s56
      %p63 = scmp.eq.s32.totalorder %s25, 1
      %p64 = por %p62, %p63
      %p65 = scmp.ne.s32.totalorder %s56, %s57
      %p66 = scmp.eq.s32.totalorder %s25, 0
      %p67 = por %p65, %p66
      %p68 = scmp.ne.s32.totalorder %s56, %s57
      %p69 = scmp.eq.s32.totalorder %s26, 1
      %p70 = por %p68, %p69
      %p72 = scmp.ne.s32.totalorder %s57, %s71
      %p73 = scmp.eq.s32.totalorder %s26, 0
      %p74 = por %p72, %p73
      %s76 = sadd.s32 %s75, 1
      %p79 = scmp.eq.s32.totalorder %s20, 1
      %p80 = scmp.ne.s32.totalorder %s75, %s77
      %p81 = scmp.eq.s32.totalorder %s20, 0
      %p82 = por %p80, %p81
      %p83 = scmp.ne.s32.totalorder %s75, %s77
      %p84 = scmp.eq.s32.totalorder %s25, 1
      %p85 = por %p83, %p84
      %p86 = scmp.ne.s32.totalorder %s77, %s78
      %p87 = scmp.eq.s32.totalorder %s25, 0
      %p88 = por %p86, %p87
      %p89 = scmp.ne.s32.totalorder %s77, %s78
      %p90 = scmp.eq.s32.totalorder %s26, 1
      %p91 = por %p89, %p90
      %p93 = scmp.ne.s32.totalorder %s78, %s92
      %p94 = scmp.eq.s32.totalorder %s26, 0
      %p95 = por %p93, %p94
      %s97 = sadd.s32 %s96, 1
      %p100 = scmp.eq.s32.totalorder %s20, 1
      %p101 = scmp.ne.s32.totalorder %s96, %s98
      %p102 = scmp.eq.s32.totalorder %s20, 0
      %p103 = por %p101, %p102
      %p104 = scmp.ne.s32.totalorder %s96, %s98
      %p105 = scmp.eq.s32.totalorder %s25, 1
      %p106 = por %p104, %p105
      %p107 = scmp.ne.s32.totalorder %s98, %s99
      %p108 = scmp.eq.s32.totalorder %s25, 0
      %p109 = por %p107, %p108
      %p110 = scmp.ne.s32.totalorder %s98, %s99
      %p111 = scmp.eq.s32.totalorder %s26, 1
      %p112 = por %p110, %p111
      %p114 = scmp.ne.s32.totalorder %s99, %s113
      %p115 = scmp.eq.s32.totalorder %s26, 0
      %p116 = por %p114, %p115
      %s118 = sadd.s32 %s117, 1
      %p121 = scmp.eq.s32.totalorder %s20, 1
      %p122 = scmp.ne.s32.totalorder %s117, %s119
      %p123 = scmp.eq.s32.totalorder %s20, 0
      %p124 = por %p122, %p123
      %p125 = scmp.ne.s32.totalorder %s117, %s119
      %p126 = scmp.eq.s32.totalorder %s25, 1
      %p127 = por %p125, %p126
      %p128 = scmp.ne.s32.totalorder %s119, %s120
      %p129 = scmp.eq.s32.totalorder %s25, 0
      %p130 = por %p128, %p129
      %p131 = scmp.ne.s32.totalorder %s119, %s120
      %p132 = scmp.eq.s32.totalorder %s26, 1
      %p133 = por %p131, %p132
      %p135 = scmp.ne.s32.totalorder %s120, %s134
      %p136 = scmp.eq.s32.totalorder %s26, 0
      %p137 = por %p135, %p136
      %s139 = sadd.s32 %s138, 1
      %p142 = scmp.eq.s32.totalorder %s20, 1
      %p143 = scmp.ne.s32.totalorder %s138, %s140
      %p144 = scmp.eq.s32.totalorder %s20, 0
      %p145 = por %p143, %p144
      %p146 = scmp.ne.s32.totalorder %s138, %s140
      %p147 = scmp.eq.s32.totalorder %s25, 1
      %p148 = por %p146, %p147
      %p149 = scmp.ne.s32.totalorder %s140, %s141
      %p150 = scmp.eq.s32.totalorder %s25, 0
      %p151 = por %p149, %p150
      %p152 = scmp.ne.s32.totalorder %s140, %s141
      %p153 = scmp.eq.s32.totalorder %s26, 1
      %p154 = por %p152, %p153
      %p156 = scmp.ne.s32.totalorder %s141, %s155
      %p157 = scmp.eq.s32.totalorder %s26, 0
      %p158 = por %p156, %p157
      %s160 = sadd.s32 %s159, 1
      %p163 = scmp.eq.s32.totalorder %s20, 1
      %p164 = scmp.ne.s32.totalorder %s159, %s161
      %p165 = scmp.eq.s32.totalorder %s20, 0
      %p166 = por %p164, %p165
      %p167 = scmp.ne.s32.totalorder %s159, %s161
      %p168 = scmp.eq.s32.totalorder %s25, 1
      %p169 = por %p167, %p168
      %p170 = scmp.ne.s32.totalorder %s161, %s162
      %p171 = scmp.eq.s32.totalorder %s25, 0
      %p172 = por %p170, %p171
      %p173 = scmp.ne.s32.totalorder %s161, %s162
      %p174 = scmp.eq.s32.totalorder %s26, 1
      %p175 = por %p173, %p174
      %p177 = scmp.ne.s32.totalorder %s162, %s176
      %p178 = scmp.eq.s32.totalorder %s26, 0
      %p179 = por %p177, %p178
      %s180 = ssub.s32 %s20, %s27
      %p181 = scmp.eq.s32.totalorder %s180, 0
      %s183 = sadd.s32 %s182, 1
      %s184 = scalar_select %p181, %s182, %s183
      %p187 = pneg %p181
      %p188 = scmp.eq.s32.totalorder %s20, 1
      %p189 = por %p187, %p188
      %p190 = scmp.ne.s32.totalorder %s182, %s185
      %p191 = scmp.eq.s32.totalorder %s20, 0
      %p192 = por %p190, %p191
      %p193 = scmp.ne.s32.totalorder %s182, %s185
      %p194 = scmp.eq.s32.totalorder %s25, 1
      %p195 = por %p193, %p194
      %p196 = scmp.ne.s32.totalorder %s185, %s186
      %p197 = scmp.eq.s32.totalorder %s25, 0
      %p198 = por %p196, %p197
      %p199 = scmp.ne.s32.totalorder %s185, %s186
      %p200 = scmp.eq.s32.totalorder %s26, 1
      %p201 = por %p199, %p200
      %p203 = scmp.ne.s32.totalorder %s186, %s202
      %p204 = scmp.eq.s32.totalorder %s26, 0
      %p205 = por %p203, %p204
      %p206 = scmp.le.s32.totalorder 1, %s20
      %p207 = scmp.lt.s32.totalorder %s20, 3
      %p208 = pnand %p206, %p207
      %p209 = pneg %p208
      // Predicated region
      $region9: #{tpu_custom_call.1} parent=5 // pred_check
        _
      $region10: #{tpu_custom_call.1} parent=5 // pred_check_branch
        %211 = sbr.rel (%p208) target = $region12
      $region11: #{tpu_custom_call.1} parent=5 // pred_region
        %s212 = ssub.s32 %s20, 1
        // Predicated region
        $region13: #{tpu_custom_call.1} parent=11 // pred_check
          %p213 = pneg %p67
        $region14: #{tpu_custom_call.1} parent=11 // pred_check_branch
          %215 = sbr.rel (%p213) target = $region16
        $region15: #{tpu_custom_call.1} parent=11 // pred_region
          %s217 = ssub.s32 3072, 3072
          %218 = vsyncadd [#allocation7], %s217
          %s219 = sshll.u32 [#allocation6], 4
          %s220 = int_to_ptr.vmem [resolvable:$true] %s219
          %225 = dma.hbm_to_vmem [thread:$0]  %s1, 3072, %s220, [#allocation7], 64, 64, 4
        $region16: #{tpu_custom_call.1} parent=11 // pred_fallthru
          _
        // Predicated region
        $region17: #{tpu_custom_call.1} parent=11 // pred_check
          %p226 = pneg %p88
        $region18: #{tpu_custom_call.1} parent=11 // pred_check_branch
          %228 = sbr.rel (%p226) target = $region20
        $region19: #{tpu_custom_call.1} parent=11 // pred_region
          _
        $region20: #{tpu_custom_call.1} parent=11 // pred_fallthru
          _
        // Predicated region
        $region21: #{tpu_custom_call.1} parent=11 // pred_check
          %p229 = pneg %p109
        $region22: #{tpu_custom_call.1} parent=11 // pred_check_branch
          %231 = sbr.rel (%p229) target = $region24
        $region23: #{tpu_custom_call.1} parent=11 // pred_region
          _
        $region24: #{tpu_custom_call.1} parent=11 // pred_fallthru
          _
        // Predicated region
        $region25: #{tpu_custom_call.1} parent=11 // pred_check
          %p232 = pneg %p130
        $region26: #{tpu_custom_call.1} parent=11 // pred_check_branch
          %234 = sbr.rel (%p232) target = $region28
        $region27: #{tpu_custom_call.1} parent=11 // pred_region
          %s236 = ssub.s32 3072, 3072
          %237 = vsyncadd [#allocation7], %s236
          %s238 = sshll.u32 [#allocation8], 4
          %s239 = int_to_ptr.vmem [resolvable:$true] %s238
          %244 = dma.hbm_to_vmem [thread:$0]  %s4, 3072, %s239, [#allocation7], 64, 64, 4
        $region28: #{tpu_custom_call.1} parent=11 // pred_fallthru
          _
        // Predicated region
        $region29: #{tpu_custom_call.1} parent=11 // pred_check
          %p245 = pneg %p151
        $region30: #{tpu_custom_call.1} parent=11 // pred_check_branch
          %247 = sbr.rel (%p245) target = $region32
        $region31: #{tpu_custom_call.1} parent=11 // pred_region
          _
        $region32: #{tpu_custom_call.1} parent=11 // pred_fallthru
          _
        // Predicated region
        $region33: #{tpu_custom_call.1} parent=11 // pred_check
          %p248 = pneg %p172
        $region34: #{tpu_custom_call.1} parent=11 // pred_check_branch
          %250 = sbr.rel (%p248) target = $region36
        $region35: #{tpu_custom_call.1} parent=11 // pred_region
          _
        $region36: #{tpu_custom_call.1} parent=11 // pred_fallthru
          _
      $region12: #{tpu_custom_call.1} parent=5 // pred_fallthru
        _
      %p251 = scmp.lt.s32.totalorder %s20, 2
      // Predicated region
      $region37: #{tpu_custom_call.1} parent=5 // pred_check
        %p252 = pneg %p251
      $region38: #{tpu_custom_call.1} parent=5 // pred_check_branch
        %254 = sbr.rel (%p252) target = $region40
      $region39: #{tpu_custom_call.1} parent=5 // pred_region
        // Predicated region
        $region41: #{tpu_custom_call.1} parent=39 // pred_check
          %p255 = pneg %p40
        $region42: #{tpu_custom_call.1} parent=39 // pred_check_branch
          %257 = sbr.rel (%p255) target = $region44
        $region43: #{tpu_custom_call.1} parent=39 // pred_region
          %s258 = sand.u32 %s30, 1
          %s259 = scalar_lea.sflag [#allocation4], %s258
          %s260 = sand.u32 %s30, 1
          %s261 = smul.addr %s260, 256
          %s262 = scalar_lea.vmem [#allocation3], %s261
          %s263 = smul.u32 32, %s20
          %s265 = ssub.s32 4096, 4096
          %266 = vsyncadd %s259, %s265
          %s267 = smul.addr %s263, 128
          %s268 = scalar_lea.hbm %s0, %s267
          %s269 = sshll.u32 %s262, 4
          %s270 = int_to_ptr.vmem [resolvable:$true] %s269
          %275 = dma.hbm_to_vmem [thread:$0]  %s268, 4096, %s270, %s259, 128, 128, 8
        $region44: #{tpu_custom_call.1} parent=39 // pred_fallthru
          _
      $region40: #{tpu_custom_call.1} parent=5 // pred_fallthru
        _
      %p276 = scmp.le.s32.totalorder 1, %s20
      %p277 = scmp.lt.s32.totalorder %s20, 3
      %p278 = pnand %p276, %p277
      %p279 = pneg %p278
      // Predicated region
      $region45: #{tpu_custom_call.1} parent=5 // pred_check
        _
      $region46: #{tpu_custom_call.1} parent=5 // pred_check_branch
        %281 = sbr.rel (%p278) target = $region48
      $region47: #{tpu_custom_call.1} parent=5 // pred_region
        %s282 = ssub.s32 %s20, 1
        %s283 = sand.u32 %s33, 1
        %s284 = scalar_lea.sflag [#allocation4], %s283
        %s285 = sand.u32 %s33, 1
        %s286 = smul.addr %s285, 256
        %s287 = scalar_lea.vmem [#allocation3], %s286
        // Predicated region
        $region49: #{tpu_custom_call.1} parent=47 // pred_check
          %p288 = pneg %p46
        $region50: #{tpu_custom_call.1} parent=47 // pred_check_branch
          %290 = sbr.rel (%p288) target = $region52
        $region51: #{tpu_custom_call.1} parent=47 // pred_region
          %291 = dma.done %s284, 4096
        $region52: #{tpu_custom_call.1} parent=47 // pred_fallthru
          _
        // Predicated region
        $region53: #{tpu_custom_call.1} parent=47 // pred_check
          %p292 = pneg %p67
        $region54: #{tpu_custom_call.1} parent=47 // pred_check_branch
          %294 = sbr.rel (%p292) target = $region56
        $region55: #{tpu_custom_call.1} parent=47 // pred_region
          %295 = dma.done [#allocation7], 3072
        $region56: #{tpu_custom_call.1} parent=47 // pred_fallthru
          _
        // Predicated region
        $region57: #{tpu_custom_call.1} parent=47 // pred_check
          %p296 = pneg %p130
        $region58: #{tpu_custom_call.1} parent=47 // pred_check_branch
          %298 = sbr.rel (%p296) target = $region60
        $region59: #{tpu_custom_call.1} parent=47 // pred_region
          %299 = dma.done [#allocation7], 3072
        $region60: #{tpu_custom_call.1} parent=47 // pred_fallthru
          _
        %s300 = sand.u32 %s33, 1
        %s301 = scalar_lea.sflag [#allocation4], %s300
        %s302 = sand.u32 %s33, 1
        %s303 = smul.addr %s302, 256
        %s304 = scalar_lea.vmem [#allocation3], %s303
        %p305 = pneg %p46
        %p306 = pneg %p43
        %p307 = pneg %p67
        %p308 = pneg %p64
        %p309 = pneg %p88
        %p310 = pneg %p85
        %p311 = pneg %p109
        %p312 = pneg %p106
        %p313 = pneg %p130
        %p314 = pneg %p127
        %p315 = pneg %p151
        %p316 = pneg %p148
        %p317 = pneg %p172
        %p318 = pneg %p169
        %p319 = pneg %p198
        %p320 = pneg %p195
        %s321 = sand.u32 %s185, 1
        %s322 = scalar_lea.sflag [#allocation5], %s321
        %s323 = sand.u32 %s185, 1
        %s324 = smul.addr %s323, 256
        %s325 = scalar_lea.vmem [#allocation9], %s324
        %s326 = smul.u32 32, %s25
        %s327 = smul.u32 32, %s25
        %v329 = vld [vmem:[%s287] sm:$0xff]
        %v330 = vld [vmem:[%s287 + $0x8] sm:$0xff]
        %v331 = vld [vmem:[%s287 + $0x10] sm:$0xff]
        %v332 = vld [vmem:[%s287 + $0x18] sm:$0xff]
        %v333 = vld [vmem:[%s287 + $0x20] sm:$0xff]
        %v334 = vld [vmem:[%s287 + $0x28] sm:$0xff]
        %v335 = vld [vmem:[%s287 + $0x30] sm:$0xff]
        %v336 = vld [vmem:[%s287 + $0x38] sm:$0xff]
        %v337 = vld [vmem:[%s287 + $0x40] sm:$0xff]
        %v338 = vld [vmem:[%s287 + $0x48] sm:$0xff]
        %v339 = vld [vmem:[%s287 + $0x50] sm:$0xff]
        %v340 = vld [vmem:[%s287 + $0x58] sm:$0xff]
        %v341 = vld [vmem:[%s287 + $0x60] sm:$0xff]
        %v342 = vld [vmem:[%s287 + $0x68] sm:$0xff]
        %v343 = vld [vmem:[%s287 + $0x70] sm:$0xff]
        %v344 = vld [vmem:[%s287 + $0x78] sm:$0xff]
        %v345 = vld [vmem:[%s287 + $0x80] sm:$0xff]
        %v346 = vld [vmem:[%s287 + $0x88] sm:$0xff]
        %v347 = vld [vmem:[%s287 + $0x90] sm:$0xff]
        %v348 = vld [vmem:[%s287 + $0x98] sm:$0xff]
        %v349 = vld [vmem:[%s287 + $0xa0] sm:$0xff]
        %v350 = vld [vmem:[%s287 + $0xa8] sm:$0xff]
        %v351 = vld [vmem:[%s287 + $0xb0] sm:$0xff]
        %v352 = vld [vmem:[%s287 + $0xb8] sm:$0xff]
        %v353 = vld [vmem:[%s287 + $0xc0] sm:$0xff]
        %v354 = vld [vmem:[%s287 + $0xc8] sm:$0xff]
        %v355 = vld [vmem:[%s287 + $0xd0] sm:$0xff]
        %v356 = vld [vmem:[%s287 + $0xd8] sm:$0xff]
        %v357 = vld [vmem:[%s287 + $0xe0] sm:$0xff]
        %v358 = vld [vmem:[%s287 + $0xe8] sm:$0xff]
        %v359 = vld [vmem:[%s287 + $0xf0] sm:$0xff]
        %v360 = vld [vmem:[%s287 + $0xf8] sm:$0xff]
        %v361 = vlaneseq
        %v362 = vshrl.u32 %v361, 7
        %v363 = vadd.s32 %v362, 8
        %vm364 = vcmp.ne.s32.totalorder %v362, 0
        %vm365 = vcmp.ne.s32.totalorder %v363, 0
        %vm366 = vcmp.ne.s32.totalorder %v362, 15
        %vm367 = vcmp.ne.s32.totalorder %v363, 15
        %v368 = vrot.slane %v329, 7
        %v369 = vrot.slane %v330, 7
        %v370 = vrot.slane %v331, 7
        %v371 = vrot.slane %v332, 7
        %v372 = vrot.slane %v333, 7
        %v373 = vrot.slane %v334, 7
        %v374 = vrot.slane %v335, 7
        %v375 = vrot.slane %v336, 7
        %v376 = vrot.slane %v337, 7
        %v377 = vrot.slane %v338, 7
        %v378 = vrot.slane %v339, 7
        %v379 = vrot.slane %v340, 7
        %v380 = vrot.slane %v341, 7
        %v381 = vrot.slane %v342, 7
        %v382 = vrot.slane %v343, 7
        %v383 = vrot.slane %v344, 7
        %v384 = vrot.slane %v345, 7
        %v385 = vrot.slane %v346, 7
        %v386 = vrot.slane %v347, 7
        %v387 = vrot.slane %v348, 7
        %v388 = vrot.slane %v349, 7
        %v389 = vrot.slane %v350, 7
        %v390 = vrot.slane %v351, 7
        %v391 = vrot.slane %v352, 7
        %v392 = vrot.slane %v353, 7
        %v393 = vrot.slane %v354, 7
        %v394 = vrot.slane %v355, 7
        %v395 = vrot.slane %v356, 7
        %v396 = vrot.slane %v357, 7
        %v397 = vrot.slane %v358, 7
        %v398 = vrot.slane %v359, 7
        %v399 = vrot.slane %v360, 7
        %vm400 = vcmp.lt.s32.totalorder %v362, 1
        %v401 = vsel %vm400, %v398, %v399
        %v402 = vsel %vm400, %v397, %v398
        %v403 = vsel %vm400, %v396, %v397
        %v404 = vsel %vm400, %v395, %v396
        %v405 = vsel %vm400, %v394, %v395
        %v406 = vsel %vm400, %v393, %v394
        %v407 = vsel %vm400, %v392, %v393
        %v408 = vsel %vm400, %v391, %v392
        %v409 = vsel %vm400, %v390, %v391
        %v410 = vsel %vm400, %v389, %v390
        %v411 = vsel %vm400, %v388, %v389
        %v412 = vsel %vm400, %v387, %v388
        %v413 = vsel %vm400, %v386, %v387
        %v414 = vsel %vm400, %v385, %v386
        %v415 = vsel %vm400, %v384, %v385
        %v416 = vsel %vm400, %v383, %v384
        %v417 = vsel %vm400, %v382, %v383
        %v418 = vsel %vm400, %v381, %v382
        %v419 = vsel %vm400, %v380, %v381
        %v420 = vsel %vm400, %v379, %v380
        %v421 = vsel %vm400, %v378, %v379
        %v422 = vsel %vm400, %v377, %v378
        %v423 = vsel %vm400, %v376, %v377
        %v424 = vsel %vm400, %v375, %v376
        %v425 = vsel %vm400, %v374, %v375
        %v426 = vsel %vm400, %v373, %v374
        %v427 = vsel %vm400, %v372, %v373
        %v428 = vsel %vm400, %v371, %v372
        %v429 = vsel %vm400, %v370, %v371
        %v430 = vsel %vm400, %v369, %v370
        %v431 = vsel %vm400, %v368, %v369
        %v432 = vsel %vm400, %v399, %v368
        %v433 = vsel %vm364, %v432, 0.0
        %v434 = vsel %vm365, %v431, 0.0
        %v435 = vsel %vm364, %v430, 0.0
        %v436 = vsel %vm365, %v429, 0.0
        %v437 = vsel %vm364, %v428, 0.0
        %v438 = vsel %vm365, %v427, 0.0
        %v439 = vsel %vm364, %v426, 0.0
        %v440 = vsel %vm365, %v425, 0.0
        %v441 = vsel %vm364, %v424, 0.0
        %v442 = vsel %vm365, %v423, 0.0
        %v443 = vsel %vm364, %v422, 0.0
        %v444 = vsel %vm365, %v421, 0.0
        %v445 = vsel %vm364, %v420, 0.0
        %v446 = vsel %vm365, %v419, 0.0
        %v447 = vsel %vm364, %v418, 0.0
        %v448 = vsel %vm365, %v417, 0.0
        %v449 = vsel %vm364, %v416, 0.0
        %v450 = vsel %vm365, %v415, 0.0
        %v451 = vsel %vm364, %v414, 0.0
        %v452 = vsel %vm365, %v413, 0.0
        %v453 = vsel %vm364, %v412, 0.0
        %v454 = vsel %vm365, %v411, 0.0
        %v455 = vsel %vm364, %v410, 0.0
        %v456 = vsel %vm365, %v409, 0.0
        %v457 = vsel %vm364, %v408, 0.0
        %v458 = vsel %vm365, %v407, 0.0
        %v459 = vsel %vm364, %v406, 0.0
        %v460 = vsel %vm365, %v405, 0.0
        %v461 = vsel %vm364, %v404, 0.0
        %v462 = vsel %vm365, %v403, 0.0
        %v463 = vsel %vm364, %v402, 0.0
        %v464 = vsel %vm365, %v401, 0.0
        %v465 = vrot.slane %v329, 1
        %v466 = vrot.slane %v330, 1
        %v467 = vrot.slane %v331, 1
        %v468 = vrot.slane %v332, 1
        %v469 = vrot.slane %v333, 1
        %v470 = vrot.slane %v334, 1
        %v471 = vrot.slane %v335, 1
        %v472 = vrot.slane %v336, 1
        %v473 = vrot.slane %v337, 1
        %v474 = vrot.slane %v338, 1
        %v475 = vrot.slane %v339, 1
        %v476 = vrot.slane %v340, 1
        %v477 = vrot.slane %v341, 1
        %v478 = vrot.slane %v342, 1
        %v479 = vrot.slane %v343, 1
        %v480 = vrot.slane %v344, 1
        %v481 = vrot.slane %v345, 1
        %v482 = vrot.slane %v346, 1
        %v483 = vrot.slane %v347, 1
        %v484 = vrot.slane %v348, 1
        %v485 = vrot.slane %v349, 1
        %v486 = vrot.slane %v350, 1
        %v487 = vrot.slane %v351, 1
        %v488 = vrot.slane %v352, 1
        %v489 = vrot.slane %v353, 1
        %v490 = vrot.slane %v354, 1
        %v491 = vrot.slane %v355, 1
        %v492 = vrot.slane %v356, 1
        %v493 = vrot.slane %v357, 1
        %v494 = vrot.slane %v358, 1
        %v495 = vrot.slane %v359, 1
        %v496 = vrot.slane %v360, 1
        %vm497 = vcmp.lt.s32.totalorder %v362, 7
        %v498 = vsel %vm497, %v495, %v496
        %v499 = vsel %vm497, %v494, %v495
        %v500 = vsel %vm497, %v493, %v494
        %v501 = vsel %vm497, %v492, %v493
        %v502 = vsel %vm497, %v491, %v492
        %v503 = vsel %vm497, %v490, %v491
        %v504 = vsel %vm497, %v489, %v490
        %v505 = vsel %vm497, %v488, %v489
        %v506 = vsel %vm497, %v487, %v488
        %v507 = vsel %vm497, %v486, %v487
        %v508 = vsel %vm497, %v485, %v486
        %v509 = vsel %vm497, %v484, %v485
        %v510 = vsel %vm497, %v483, %v484
        %v511 = vsel %vm497, %v482, %v483
        %v512 = vsel %vm497, %v481, %v482
        %v513 = vsel %vm497, %v480, %v481
        %v514 = vsel %vm497, %v479, %v480
        %v515 = vsel %vm497, %v478, %v479
        %v516 = vsel %vm497, %v477, %v478
        %v517 = vsel %vm497, %v476, %v477
        %v518 = vsel %vm497, %v475, %v476
        %v519 = vsel %vm497, %v474, %v475
        %v520 = vsel %vm497, %v473, %v474
        %v521 = vsel %vm497, %v472, %v473
        %v522 = vsel %vm497, %v471, %v472
        %v523 = vsel %vm497, %v470, %v471
        %v524 = vsel %vm497, %v469, %v470
        %v525 = vsel %vm497, %v468, %v469
        %v526 = vsel %vm497, %v467, %v468
        %v527 = vsel %vm497, %v466, %v467
        %v528 = vsel %vm497, %v465, %v466
        %v529 = vsel %vm497, %v496, %v465
        %v530 = vsel %vm366, %v528, 0.0
        %v531 = vsel %vm367, %v527, 0.0
        %v532 = vsel %vm366, %v526, 0.0
        %v533 = vsel %vm367, %v525, 0.0
        %v534 = vsel %vm366, %v524, 0.0
        %v535 = vsel %vm367, %v523, 0.0
        %v536 = vsel %vm366, %v522, 0.0
        %v537 = vsel %vm367, %v521, 0.0
        %v538 = vsel %vm366, %v520, 0.0
        %v539 = vsel %vm367, %v519, 0.0
        %v540 = vsel %vm366, %v518, 0.0
        %v541 = vsel %vm367, %v517, 0.0
        %v542 = vsel %vm366, %v516, 0.0
        %v543 = vsel %vm367, %v515, 0.0
        %v544 = vsel %vm366, %v514, 0.0
        %v545 = vsel %vm367, %v513, 0.0
        %v546 = vsel %vm366, %v512, 0.0
        %v547 = vsel %vm367, %v511, 0.0
        %v548 = vsel %vm366, %v510, 0.0
        %v549 = vsel %vm367, %v509, 0.0
        %v550 = vsel %vm366, %v508, 0.0
        %v551 = vsel %vm367, %v507, 0.0
        %v552 = vsel %vm366, %v506, 0.0
        %v553 = vsel %vm367, %v505, 0.0
        %v554 = vsel %vm366, %v504, 0.0
        %v555 = vsel %vm367, %v503, 0.0
        %v556 = vsel %vm366, %v502, 0.0
        %v557 = vsel %vm367, %v501, 0.0
        %v558 = vsel %vm366, %v500, 0.0
        %v559 = vsel %vm367, %v499, 0.0
        %v560 = vsel %vm366, %v498, 0.0
        %v561 = vsel %vm367, %v529, 0.0
        %v562 = vpack.c.bf16 %v434, %v433
        %v563 = vpack.c.bf16 %v436, %v435
        %v564 = vpack.c.bf16 %v438, %v437
        %v565 = vpack.c.bf16 %v440, %v439
        %v566 = vpack.c.bf16 %v442, %v441
        %v567 = vpack.c.bf16 %v444, %v443
        %v568 = vpack.c.bf16 %v446, %v445
        %v569 = vpack.c.bf16 %v448, %v447
        %v570 = vpack.c.bf16 %v450, %v449
        %v571 = vpack.c.bf16 %v452, %v451
        %v572 = vpack.c.bf16 %v454, %v453
        %v573 = vpack.c.bf16 %v456, %v455
        %v574 = vpack.c.bf16 %v458, %v457
        %v575 = vpack.c.bf16 %v460, %v459
        %v576 = vpack.c.bf16 %v462, %v461
        %v577 = vpack.c.bf16 %v464, %v463
        %578 = vst [vmem:[#allocation2] sm:$0xff] %v562
        %579 = vst [vmem:[#allocation2 + $0x18] sm:$0xff] %v563
        %580 = vst [vmem:[#allocation2 + $0x30] sm:$0xff] %v564
        %581 = vst [vmem:[#allocation2 + $0x48] sm:$0xff] %v565
        %582 = vst [vmem:[#allocation2 + $0x60] sm:$0xff] %v566
        %583 = vst [vmem:[#allocation2 + $0x78] sm:$0xff] %v567
        %584 = vst [vmem:[#allocation2 + $0x90] sm:$0xff] %v568
        %585 = vst [vmem:[#allocation2 + $0xa8] sm:$0xff] %v569
        %586 = vst [vmem:[#allocation2 + $0xc0] sm:$0xff] %v570
        %587 = vst [vmem:[#allocation2 + $0xd8] sm:$0xff] %v571
        %588 = vst [vmem:[#allocation2 + $0xf0] sm:$0xff] %v572
        %589 = vst [vmem:[#allocation2 + $0x108] sm:$0xff] %v573
        %590 = vst [vmem:[#allocation2 + $0x120] sm:$0xff] %v574
        %591 = vst [vmem:[#allocation2 + $0x138] sm:$0xff] %v575
        %592 = vst [vmem:[#allocation2 + $0x150] sm:$0xff] %v576
        %593 = vst [vmem:[#allocation2 + $0x168] sm:$0xff] %v577
        %v594 = vpack.c.bf16 %v330, %v329
        %v595 = vpack.c.bf16 %v332, %v331
        %v596 = vpack.c.bf16 %v334, %v333
        %v597 = vpack.c.bf16 %v336, %v335
        %v598 = vpack.c.bf16 %v338, %v337
        %v599 = vpack.c.bf16 %v340, %v339
        %v600 = vpack.c.bf16 %v342, %v341
        %v601 = vpack.c.bf16 %v344, %v343
        %v602 = vpack.c.bf16 %v346, %v345
        %v603 = vpack.c.bf16 %v348, %v347
        %v604 = vpack.c.bf16 %v350, %v349
        %v605 = vpack.c.bf16 %v352, %v351
        %v606 = vpack.c.bf16 %v354, %v353
        %v607 = vpack.c.bf16 %v356, %v355
        %v608 = vpack.c.bf16 %v358, %v357
        %v609 = vpack.c.bf16 %v360, %v359
        %610 = vst [vmem:[#allocation2 + $0x8] sm:$0xff] %v594
        %611 = vst [vmem:[#allocation2 + $0x20] sm:$0xff] %v595
        %612 = vst [vmem:[#allocation2 + $0x38] sm:$0xff] %v596
        %613 = vst [vmem:[#allocation2 + $0x50] sm:$0xff] %v597
        %614 = vst [vmem:[#allocation2 + $0x68] sm:$0xff] %v598
        %615 = vst [vmem:[#allocation2 + $0x80] sm:$0xff] %v599
        %616 = vst [vmem:[#allocation2 + $0x98] sm:$0xff] %v600
        %617 = vst [vmem:[#allocation2 + $0xb0] sm:$0xff] %v601
        %618 = vst [vmem:[#allocation2 + $0xc8] sm:$0xff] %v602
        %619 = vst [vmem:[#allocation2 + $0xe0] sm:$0xff] %v603
        %620 = vst [vmem:[#allocation2 + $0xf8] sm:$0xff] %v604
        %621 = vst [vmem:[#allocation2 + $0x110] sm:$0xff] %v605
        %622 = vst [vmem:[#allocation2 + $0x128] sm:$0xff] %v606
        %623 = vst [vmem:[#allocation2 + $0x140] sm:$0xff] %v607
        %624 = vst [vmem:[#allocation2 + $0x158] sm:$0xff] %v608
        %625 = vst [vmem:[#allocation2 + $0x170] sm:$0xff] %v609
        %v626 = vpack.c.bf16 %v531, %v530
        %v627 = vpack.c.bf16 %v533, %v532
        %v628 = vpack.c.bf16 %v535, %v534
        %v629 = vpack.c.bf16 %v537, %v536
        %v630 = vpack.c.bf16 %v539, %v538
        %v631 = vpack.c.bf16 %v541, %v540
        %v632 = vpack.c.bf16 %v543, %v542
        %v633 = vpack.c.bf16 %v545, %v544
        %v634 = vpack.c.bf16 %v547, %v546
        %v635 = vpack.c.bf16 %v549, %v548
        %v636 = vpack.c.bf16 %v551, %v550
        %v637 = vpack.c.bf16 %v553, %v552
        %v638 = vpack.c.bf16 %v555, %v554
        %v639 = vpack.c.bf16 %v557, %v556
        %v640 = vpack.c.bf16 %v559, %v558
        %v641 = vpack.c.bf16 %v561, %v560
        %642 = vst [vmem:[#allocation2 + $0x10] sm:$0xff] %v626
        %643 = vst [vmem:[#allocation2 + $0x28] sm:$0xff] %v627
        %644 = vst [vmem:[#allocation2 + $0x40] sm:$0xff] %v628
        %645 = vst [vmem:[#allocation2 + $0x58] sm:$0xff] %v629
        %646 = vst [vmem:[#allocation2 + $0x70] sm:$0xff] %v630
        %647 = vst [vmem:[#allocation2 + $0x88] sm:$0xff] %v631
        %648 = vst [vmem:[#allocation2 + $0xa0] sm:$0xff] %v632
        %649 = vst [vmem:[#allocation2 + $0xb8] sm:$0xff] %v633
        %650 = vst [vmem:[#allocation2 + $0xd0] sm:$0xff] %v634
        %651 = vst [vmem:[#allocation2 + $0xe8] sm:$0xff] %v635
        %652 = vst [vmem:[#allocation2 + $0x100] sm:$0xff] %v636
        %653 = vst [vmem:[#allocation2 + $0x118] sm:$0xff] %v637
        %654 = vst [vmem:[#allocation2 + $0x130] sm:$0xff] %v638
        %655 = vst [vmem:[#allocation2 + $0x148] sm:$0xff] %v639
        %656 = vst [vmem:[#allocation2 + $0x160] sm:$0xff] %v640
        %657 = vst [vmem:[#allocation2 + $0x178] sm:$0xff] %v641
        %v658 = vld [vmem:[#allocation2] sm:$0xff]
        %v659 = vld [vmem:[#allocation2 + $0x8] sm:$0xff]
        %v660 = vld [vmem:[#allocation2 + $0x10] sm:$0xff]
        %v661 = vld [vmem:[#allocation2 + $0x18] sm:$0xff]
        %v662 = vld [vmem:[#allocation2 + $0x20] sm:$0xff]
        %v663 = vld [vmem:[#allocation2 + $0x28] sm:$0xff]
        %v664 = vld [vmem:[#allocation2 + $0x30] sm:$0xff]
        %v665 = vld [vmem:[#allocation2 + $0x38] sm:$0xff]
        %v666 = vld [vmem:[#allocation2 + $0x40] sm:$0xff]
        %v667 = vld [vmem:[#allocation2 + $0x48] sm:$0xff]
        %v668 = vld [vmem:[#allocation2 + $0x50] sm:$0xff]
        %v669 = vld [vmem:[#allocation2 + $0x58] sm:$0xff]
        %v670 = vld [vmem:[#allocation2 + $0x60] sm:$0xff]
        %v671 = vld [vmem:[#allocation2 + $0x68] sm:$0xff]
        %v672 = vld [vmem:[#allocation2 + $0x70] sm:$0xff]
        %v673 = vld [vmem:[#allocation2 + $0x78] sm:$0xff]
        %v674 = vld [vmem:[#allocation2 + $0x80] sm:$0xff]
        %v675 = vld [vmem:[#allocation2 + $0x88] sm:$0xff]
        %v676 = vld [vmem:[#allocation2 + $0x90] sm:$0xff]
        %v677 = vld [vmem:[#allocation2 + $0x98] sm:$0xff]
        %v678 = vld [vmem:[#allocation2 + $0xa0] sm:$0xff]
        %v679 = vld [vmem:[#allocation2 + $0xa8] sm:$0xff]
        %v680 = vld [vmem:[#allocation2 + $0xb0] sm:$0xff]
        %v681 = vld [vmem:[#allocation2 + $0xb8] sm:$0xff]
        %v682 = vld [vmem:[#allocation2 + $0xc0] sm:$0xff]
        %v683 = vld [vmem:[#allocation2 + $0xc8] sm:$0xff]
        %v684 = vld [vmem:[#allocation2 + $0xd0] sm:$0xff]
        %v685 = vld [vmem:[#allocation2 + $0xd8] sm:$0xff]
        %v686 = vld [vmem:[#allocation2 + $0xe0] sm:$0xff]
        %v687 = vld [vmem:[#allocation2 + $0xe8] sm:$0xff]
        %v688 = vld [vmem:[#allocation2 + $0xf0] sm:$0xff]
        %v689 = vld [vmem:[#allocation2 + $0xf8] sm:$0xff]
        %v690 = vld [vmem:[#allocation2 + $0x100] sm:$0xff]
        %v691 = vld [vmem:[#allocation2 + $0x108] sm:$0xff]
        %v692 = vld [vmem:[#allocation2 + $0x110] sm:$0xff]
        %v693 = vld [vmem:[#allocation2 + $0x118] sm:$0xff]
        %v694 = vld [vmem:[#allocation2 + $0x120] sm:$0xff]
        %v695 = vld [vmem:[#allocation2 + $0x128] sm:$0xff]
        %v696 = vld [vmem:[#allocation2 + $0x130] sm:$0xff]
        %v697 = vld [vmem:[#allocation2 + $0x138] sm:$0xff]
        %v698 = vld [vmem:[#allocation2 + $0x140] sm:$0xff]
        %v699 = vld [vmem:[#allocation2 + $0x148] sm:$0xff]
        %v700 = vld [vmem:[#allocation2 + $0x150] sm:$0xff]
        %v701 = vld [vmem:[#allocation2 + $0x158] sm:$0xff]
        %v702 = vld [vmem:[#allocation2 + $0x160] sm:$0xff]
        %v703 = vld [vmem:[#allocation2 + $0x168] sm:$0xff]
        %v704 = vld [vmem:[#allocation2 + $0x170] sm:$0xff]
        %v705 = vld [vmem:[#allocation2 + $0x178] sm:$0xff]
        %v706 = vld [vmem:[#allocation6] sm:$0xf]
        %v707 = vld [vmem:[#allocation6 + $0x4] sm:$0xf]
        %v708 = vld [vmem:[#allocation6 + $0x8] sm:$0xf]
        %v709 = vld [vmem:[#allocation6 + $0xc] sm:$0xf]
        %v710 = vld [vmem:[#allocation6 + $0x10] sm:$0xf]
        %v711 = vld [vmem:[#allocation6 + $0x14] sm:$0xf]
        %v712 = vld [vmem:[#allocation6 + $0x18] sm:$0xf]
        %v713 = vld [vmem:[#allocation6 + $0x1c] sm:$0xf]
        %v714 = vld [vmem:[#allocation6 + $0x20] sm:$0xf]
        %v715 = vld [vmem:[#allocation6 + $0x24] sm:$0xf]
        %v716 = vld [vmem:[#allocation6 + $0x28] sm:$0xf]
        %v717 = vld [vmem:[#allocation6 + $0x2c] sm:$0xf]
        %v718 = vld [vmem:[#allocation6 + $0x30] sm:$0xf]
        %v719 = vld [vmem:[#allocation6 + $0x34] sm:$0xf]
        %v720 = vld [vmem:[#allocation6 + $0x38] sm:$0xf]
        %v721 = vld [vmem:[#allocation6 + $0x3c] sm:$0xf]
        %v722 = vld [vmem:[#allocation6 + $0x40] sm:$0xf]
        %v723 = vld [vmem:[#allocation6 + $0x44] sm:$0xf]
        %v724 = vld [vmem:[#allocation6 + $0x48] sm:$0xf]
        %v725 = vld [vmem:[#allocation6 + $0x4c] sm:$0xf]
        %v726 = vld [vmem:[#allocation6 + $0x50] sm:$0xf]
        %v727 = vld [vmem:[#allocation6 + $0x54] sm:$0xf]
        %v728 = vld [vmem:[#allocation6 + $0x58] sm:$0xf]
        %v729 = vld [vmem:[#allocation6 + $0x5c] sm:$0xf]
        %v730 = vld [vmem:[#allocation6 + $0x60] sm:$0xf]
        %v731 = vld [vmem:[#allocation6 + $0x64] sm:$0xf]
        %v732 = vld [vmem:[#allocation6 + $0x68] sm:$0xf]
        %v733 = vld [vmem:[#allocation6 + $0x6c] sm:$0xf]
        %v734 = vld [vmem:[#allocation6 + $0x70] sm:$0xf]
        %v735 = vld [vmem:[#allocation6 + $0x74] sm:$0xf]
        %v736 = vld [vmem:[#allocation6 + $0x78] sm:$0xf]
        %v737 = vld [vmem:[#allocation6 + $0x7c] sm:$0xf]
        %v738 = vld [vmem:[#allocation6 + $0x80] sm:$0xf]
        %v739 = vld [vmem:[#allocation6 + $0x84] sm:$0xf]
        %v740 = vld [vmem:[#allocation6 + $0x88] sm:$0xf]
        %v741 = vld [vmem:[#allocation6 + $0x8c] sm:$0xf]
        %v742 = vld [vmem:[#allocation6 + $0x90] sm:$0xf]
        %v743 = vld [vmem:[#allocation6 + $0x94] sm:$0xf]
        %v744 = vld [vmem:[#allocation6 + $0x98] sm:$0xf]
        %v745 = vld [vmem:[#allocation6 + $0x9c] sm:$0xf]
        %v746 = vld [vmem:[#allocation6 + $0xa0] sm:$0xf]
        %v747 = vld [vmem:[#allocation6 + $0xa4] sm:$0xf]
        %v748 = vld [vmem:[#allocation6 + $0xa8] sm:$0xf]
        %v749 = vld [vmem:[#allocation6 + $0xac] sm:$0xf]
        %v750 = vld [vmem:[#allocation6 + $0xb0] sm:$0xf]
        %v751 = vld [vmem:[#allocation6 + $0xb4] sm:$0xf]
        %v752 = vld [vmem:[#allocation6 + $0xb8] sm:$0xf]
        %v753 = vld [vmem:[#allocation6 + $0xbc] sm:$0xf]
        %v802 = vunpack.c.l.b16 %v706
        %v803 = vunpack.c.l.b16 %v707
        %v804 = vunpack.c.l.b16 %v708
        %v805 = vunpack.c.l.b16 %v709
        %v806 = vunpack.c.l.b16 %v710
        %v807 = vunpack.c.l.b16 %v711
        %v808 = vunpack.c.l.b16 %v712
        %v809 = vunpack.c.l.b16 %v713
        %v810 = vunpack.c.l.b16 %v714
        %v811 = vunpack.c.l.b16 %v715
        %v812 = vunpack.c.l.b16 %v716
        %v813 = vunpack.c.l.b16 %v717
        %v814 = vunpack.c.l.b16 %v718
        %v815 = vunpack.c.l.b16 %v719
        %v816 = vunpack.c.l.b16 %v720
        %v817 = vunpack.c.l.b16 %v721
        %v818 = vunpack.c.l.b16 %v722
        %v819 = vunpack.c.l.b16 %v723
        %v820 = vunpack.c.l.b16 %v724
        %v821 = vunpack.c.l.b16 %v725
        %v822 = vunpack.c.l.b16 %v726
        %v823 = vunpack.c.l.b16 %v727
        %v824 = vunpack.c.l.b16 %v728
        %v825 = vunpack.c.l.b16 %v729
        %v826 = vunpack.c.l.b16 %v730
        %v827 = vunpack.c.l.b16 %v731
        %v828 = vunpack.c.l.b16 %v732
        %v829 = vunpack.c.l.b16 %v733
        %v830 = vunpack.c.l.b16 %v734
        %v831 = vunpack.c.l.b16 %v735
        %v832 = vunpack.c.l.b16 %v736
        %v833 = vunpack.c.l.b16 %v737
        %v834 = vunpack.c.l.b16 %v738
        %v835 = vunpack.c.l.b16 %v739
        %v836 = vunpack.c.l.b16 %v740
        %v837 = vunpack.c.l.b16 %v741
        %v838 = vunpack.c.l.b16 %v742
        %v839 = vunpack.c.l.b16 %v743
        %v840 = vunpack.c.l.b16 %v744
        %v841 = vunpack.c.l.b16 %v745
        %v842 = vunpack.c.l.b16 %v746
        %v843 = vunpack.c.l.b16 %v747
        %v844 = vunpack.c.l.b16 %v748
        %v845 = vunpack.c.l.b16 %v749
        %v846 = vunpack.c.l.b16 %v750
        %v847 = vunpack.c.l.b16 %v751
        %v848 = vunpack.c.l.b16 %v752
        %v849 = vunpack.c.l.b16 %v753
        %v850 = vpack.c.b16 %v803, %v802
        %v851 = vpack.c.b16 %v805, %v804
        %v852 = vpack.c.b16 %v807, %v806
        %v853 = vpack.c.b16 %v809, %v808
        %v854 = vpack.c.b16 %v811, %v810
        %v855 = vpack.c.b16 %v813, %v812
        %v856 = vpack.c.b16 %v815, %v814
        %v857 = vpack.c.b16 %v817, %v816
        %v858 = vpack.c.b16 %v819, %v818
        %v859 = vpack.c.b16 %v821, %v820
        %v860 = vpack.c.b16 %v823, %v822
        %v861 = vpack.c.b16 %v825, %v824
        %v862 = vpack.c.b16 %v827, %v826
        %v863 = vpack.c.b16 %v829, %v828
        %v864 = vpack.c.b16 %v831, %v830
        %v865 = vpack.c.b16 %v833, %v832
        %v866 = vpack.c.b16 %v835, %v834
        %v867 = vpack.c.b16 %v837, %v836
        %v868 = vpack.c.b16 %v839, %v838
        %v869 = vpack.c.b16 %v841, %v840
        %v870 = vpack.c.b16 %v843, %v842
        %v871 = vpack.c.b16 %v845, %v844
        %v872 = vpack.c.b16 %v847, %v846
        %v873 = vpack.c.b16 %v849, %v848
        %898 = vmatprep.subr.bf16.mxu0 0
        %899 = vmatpush1.bf16.msra.mxu0 %v850
        %900 = vmatprep.subr.bf16.mxu0 0
        %901 = vmatpush1.bf16.msra.mxu0 %v851
        %902 = vmatprep.subr.bf16.mxu0 0
        %903 = vmatpush1.bf16.msra.mxu0 %v852
        %904 = vmatprep.subr.bf16.mxu0 0
        %905 = vmatpush1.bf16.msra.mxu0 %v853
        %906 = vmatprep.subr.bf16.mxu0 0
        %907 = vmatpush1.bf16.msra.mxu0 %v854
        %908 = vmatprep.subr.bf16.mxu0 0
        %909 = vmatpush1.bf16.msra.mxu0 %v855
        %910 = vmatprep.subr.bf16.mxu0 0
        %911 = vmatpush1.bf16.msra.mxu0 %v856
        %912 = vmatprep.subr.bf16.mxu0 0
        %913 = vmatpush1.bf16.msra.mxu0 %v857
        %914 = vmatprep.subr.bf16.mxu0 0
        %915 = vmatpush1.bf16.msra.mxu0 %v858
        %916 = vmatprep.subr.bf16.mxu0 0
        %917 = vmatpush1.bf16.msra.mxu0 %v859
        %918 = vmatprep.subr.bf16.mxu0 0
        %919 = vmatpush1.bf16.msra.mxu0 %v860
        %920 = vmatprep.subr.bf16.mxu0 0
        %921 = vmatpush1.bf16.msra.mxu0 %v861
        %922 = vmatprep.subr.bf16.mxu0 0
        %923 = vmatpush1.bf16.msra.mxu0 %v862
        %924 = vmatprep.subr.bf16.mxu0 0
        %925 = vmatpush1.bf16.msra.mxu0 %v863
        %926 = vmatprep.subr.bf16.mxu0 0
        %927 = vmatpush1.bf16.msra.mxu0 %v864
        %928 = vmatprep.subr.bf16.mxu0 0
        %929 = vmatpush1.bf16.msra.mxu0 %v865
        %930 = vmatprep.mubr.bf16.mxu0 %v659
        %931 = vmatmul.mubr.bf16.gmra.mrb[0].mxu0 %v658
        %v932 = vpop.f32.mrb[0].mxu0
        %v933 = vadd.f32 0.0, %v932
        %v934 = vpop.f32.mrb[0].mxu0
        %v935 = vpop.f32.mrb[0].mxu0
        %v936 = vadd.f32 0.0, %v935
        %v937 = vpop.f32.mrb[0].mxu0
        %938 = vmatprep.mubr.bf16.mxu0 %v662
        %939 = vmatmul.mubr.bf16.gmra.mrb[0].mxu0 %v661
        %v940 = vpop.f32.mrb[0].mxu0
        %v941 = vadd.f32 0.0, %v940
        %v942 = vpop.f32.mrb[0].mxu0
        %v943 = vpop.f32.mrb[0].mxu0
        %v944 = vadd.f32 0.0, %v943
        %v945 = vpop.f32.mrb[0].mxu0
        %946 = vmatprep.mubr.bf16.mxu0 %v665
        %947 = vmatmul.mubr.bf16.gmra.mrb[0].mxu0 %v664
        %v948 = vpop.f32.mrb[0].mxu0
        %v949 = vadd.f32 0.0, %v948
        %v950 = vpop.f32.mrb[0].mxu0
        %v951 = vpop.f32.mrb[0].mxu0
        %v952 = vadd.f32 0.0, %v951
        %v953 = vpop.f32.mrb[0].mxu0
        %954 = vmatprep.mubr.bf16.mxu0 %v668
        %955 = vmatmul.mubr.bf16.gmra.mrb[0].mxu0 %v667
        %v956 = vpop.f32.mrb[0].mxu0
        %v957 = vadd.f32 0.0, %v956
        %v958 = vpop.f32.mrb[0].mxu0
        %v959 = vpop.f32.mrb[0].mxu0
        %v960 = vadd.f32 0.0, %v959
        %v961 = vpop.f32.mrb[0].mxu0
        %962 = vmatprep.mubr.bf16.mxu0 %v671
        %963 = vmatmul.mubr.bf16.gmra.mrb[0].mxu0 %v670
        %v964 = vpop.f32.mrb[0].mxu0
        %v965 = vadd.f32 0.0, %v964
        %v966 = vpop.f32.mrb[0].mxu0
        %v967 = vpop.f32.mrb[0].mxu0
        %v968 = vadd.f32 0.0, %v967
        %v969 = vpop.f32.mrb[0].mxu0
        %970 = vmatprep.mubr.bf16.mxu0 %v674
        %971 = vmatmul.mubr.bf16.gmra.mrb[0].mxu0 %v673
        %v972 = vpop.f32.mrb[0].mxu0
        %v973 = vadd.f32 0.0, %v972
        %v974 = vpop.f32.mrb[0].mxu0
        %v975 = vpop.f32.mrb[0].mxu0
        %v976 = vadd.f32 0.0, %v975
        %v977 = vpop.f32.mrb[0].mxu0
        %978 = vmatprep.mubr.bf16.mxu0 %v677
        %979 = vmatmul.mubr.bf16.gmra.mrb[0].mxu0 %v676
        %v980 = vpop.f32.mrb[0].mxu0
        %v981 = vadd.f32 0.0, %v980
        %v982 = vpop.f32.mrb[0].mxu0
        %v983 = vpop.f32.mrb[0].mxu0
        %v984 = vadd.f32 0.0, %v983
        %v985 = vpop.f32.mrb[0].mxu0
        %986 = vmatprep.mubr.bf16.mxu0 %v680
        %987 = vmatmul.mubr.bf16.gmra.mrb[0].mxu0 %v679
        %v988 = vpop.f32.mrb[0].mxu0
        %v989 = vadd.f32 0.0, %v988
        %v990 = vpop.f32.mrb[0].mxu0
        %v991 = vpop.f32.mrb[0].mxu0
        %v992 = vadd.f32 0.0, %v991
        %v993 = vpop.f32.mrb[0].mxu0
        %994 = vmatprep.mubr.bf16.mxu0 %v683
        %995 = vmatmul.mubr.bf16.gmra.mrb[0].mxu0 %v682
        %v996 = vpop.f32.mrb[0].mxu0
        %v997 = vadd.f32 0.0, %v996
        %v998 = vpop.f32.mrb[0].mxu0
        %v999 = vpop.f32.mrb[0].mxu0
        %v1000 = vadd.f32 0.0, %v999
        %v1001 = vpop.f32.mrb[0].mxu0
        %1002 = vmatprep.mubr.bf16.mxu0 %v686
        %1003 = vmatmul.mubr.bf16.gmra.mrb[0].mxu0 %v685
        %v1004 = vpop.f32.mrb[0].mxu0
        %v1005 = vadd.f32 0.0, %v1004
        %v1006 = vpop.f32.mrb[0].mxu0
        %v1007 = vpop.f32.mrb[0].mxu0
        %v1008 = vadd.f32 0.0, %v1007
        %v1009 = vpop.f32.mrb[0].mxu0
        %1010 = vmatprep.mubr.bf16.mxu0 %v689
        %1011 = vmatmul.mubr.bf16.gmra.mrb[0].mxu0 %v688
        %v1012 = vpop.f32.mrb[0].mxu0
        %v1013 = vadd.f32 0.0, %v1012
        %v1014 = vpop.f32.mrb[0].mxu0
        %v1015 = vpop.f32.mrb[0].mxu0
        %v1016 = vadd.f32 0.0, %v1015
        %v1017 = vpop.f32.mrb[0].mxu0
        %1018 = vmatprep.mubr.bf16.mxu0 %v692
        %1019 = vmatmul.mubr.bf16.gmra.mrb[0].mxu0 %v691
        %v1020 = vpop.f32.mrb[0].mxu0
        %v1021 = vadd.f32 0.0, %v1020
        %v1022 = vpop.f32.mrb[0].mxu0
        %v1023 = vpop.f32.mrb[0].mxu0
        %v1024 = vadd.f32 0.0, %v1023
        %v1025 = vpop.f32.mrb[0].mxu0
        %1026 = vmatprep.mubr.bf16.mxu0 %v695
        %1027 = vmatmul.mubr.bf16.gmra.mrb[0].mxu0 %v694
        %v1028 = vpop.f32.mrb[0].mxu0
        %v1029 = vadd.f32 0.0, %v1028
        %v1030 = vpop.f32.mrb[0].mxu0
        %v1031 = vpop.f32.mrb[0].mxu0
        %v1032 = vadd.f32 0.0, %v1031
        %v1033 = vpop.f32.mrb[0].mxu0
        %1034 = vmatprep.mubr.bf16.mxu0 %v698
        %1035 = vmatmul.mubr.bf16.gmra.mrb[0].mxu0 %v697
        %v1036 = vpop.f32.mrb[0].mxu0
        %v1037 = vadd.f32 0.0, %v1036
        %v1038 = vpop.f32.mrb[0].mxu0
        %v1039 = vpop.f32.mrb[0].mxu0
        %v1040 = vadd.f32 0.0, %v1039
        %v1041 = vpop.f32.mrb[0].mxu0
        %1042 = vmatprep.mubr.bf16.mxu0 %v701
        %1043 = vmatmul.mubr.bf16.gmra.mrb[0].mxu0 %v700
        %v1044 = vpop.f32.mrb[0].mxu0
        %v1045 = vadd.f32 0.0, %v1044
        %v1046 = vpop.f32.mrb[0].mxu0
        %v1047 = vpop.f32.mrb[0].mxu0
        %v1048 = vadd.f32 0.0, %v1047
        %v1049 = vpop.f32.mrb[0].mxu0
        %1050 = vmatprep.mubr.bf16.mxu0 %v704
        %1051 = vmatmul.mubr.bf16.gmra.mrb[0].mxu0 %v703
        %v1052 = vpop.f32.mrb[0].mxu0
        %v1053 = vadd.f32 0.0, %v1052
        %v1054 = vpop.f32.mrb[0].mxu0
        %v1055 = vpop.f32.mrb[0].mxu0
        %v1056 = vadd.f32 0.0, %v1055
        %v1057 = vpop.f32.mrb[0].mxu0
        %1058 = vdwg.mxu0
        %1059 = vmatprep.subr.bf16.mxu0 0
        %1060 = vmatpush1.bf16.msra.mxu0 %v866
        %1061 = vmatprep.subr.bf16.mxu0 0
        %1062 = vmatpush1.bf16.msra.mxu0 %v867
        %1063 = vmatprep.subr.bf16.mxu0 0
        %1064 = vmatpush1.bf16.msra.mxu0 %v868
        %1065 = vmatprep.subr.bf16.mxu0 0
        %1066 = vmatpush1.bf16.msra.mxu0 %v869
        %1067 = vmatprep.subr.bf16.mxu0 0
        %1068 = vmatpush1.bf16.msra.mxu0 %v870
        %1069 = vmatprep.subr.bf16.mxu0 0
        %1070 = vmatpush1.bf16.msra.mxu0 %v871
        %1071 = vmatprep.subr.bf16.mxu0 0
        %1072 = vmatpush1.bf16.msra.mxu0 %v872
        %1073 = vmatprep.subr.bf16.mxu0 0
        %1074 = vmatpush1.bf16.msra.mxu0 %v873
        %1075 = vmatprep.subr.bf16.mxu0 0
        %1076 = vmatpush1.bf16.msra.mxu0 0
        %1077 = vmatprep.subr.bf16.mxu0 0
        %1078 = vmatpush1.bf16.msra.mxu0 0
        %1079 = vmatprep.subr.bf16.mxu0 0
        %1080 = vmatpush1.bf16.msra.mxu0 0
        %1081 = vmatprep.subr.bf16.mxu0 0
        %1082 = vmatpush1.bf16.msra.mxu0 0
        %1083 = vmatprep.subr.bf16.mxu0 0
        %1084 = vmatpush1.bf16.msra.mxu0 0
        %1085 = vmatprep.subr.bf16.mxu0 0
        %1086 = vmatpush1.bf16.msra.mxu0 0
        %1087 = vmatprep.subr.bf16.mxu0 0
        %1088 = vmatpush1.bf16.msra.mxu0 0
        %1089 = vmatprep.subr.bf16.mxu0 0
        %1090 = vmatpush1.bf16.msra.mxu0 0
        %1091 = vmatprep.mubr.bf16.mxu0 0
        %1092 = vmatmul.mubr.bf16.gmra.mrb[0].mxu0 %v660
        %v1093 = vpop.f32.mrb[0].mxu0
        %v1094 = vadd.f32 %v933, %v1093
        %v1095 = vpop.f32.mrb[0].mxu0
        %v1096 = vpop.f32.mrb[0].mxu0
        %v1097 = vadd.f32 %v936, %v1096
        %v1098 = vpop.f32.mrb[0].mxu0
        %1099 = vmatprep.mubr.bf16.mxu0 0
        %1100 = vmatmul.mubr.bf16.gmra.mrb[0].mxu0 %v663
        %v1101 = vpop.f32.mrb[0].mxu0
        %v1102 = vadd.f32 %v941, %v1101
        %v1103 = vpop.f32.mrb[0].mxu0
        %v1104 = vpop.f32.mrb[0].mxu0
        %v1105 = vadd.f32 %v944, %v1104
        %v1106 = vpop.f32.mrb[0].mxu0
        %1107 = vmatprep.mubr.bf16.mxu0 0
        %1108 = vmatmul.mubr.bf16.gmra.mrb[0].mxu0 %v666
        %v1109 = vpop.f32.mrb[0].mxu0
        %v1110 = vadd.f32 %v949, %v1109
        %v1111 = vpop.f32.mrb[0].mxu0
        %v1112 = vpop.f32.mrb[0].mxu0
        %v1113 = vadd.f32 %v952, %v1112
        %v1114 = vpop.f32.mrb[0].mxu0
        %1115 = vmatprep.mubr.bf16.mxu0 0
        %1116 = vmatmul.mubr.bf16.gmra.mrb[0].mxu0 %v669
        %v1117 = vpop.f32.mrb[0].mxu0
        %v1118 = vadd.f32 %v957, %v1117
        %v1119 = vpop.f32.mrb[0].mxu0
        %v1120 = vpop.f32.mrb[0].mxu0
        %v1121 = vadd.f32 %v960, %v1120
        %v1122 = vpop.f32.mrb[0].mxu0
        %1123 = vmatprep.mubr.bf16.mxu0 0
        %1124 = vmatmul.mubr.bf16.gmra.mrb[0].mxu0 %v672
        %v1125 = vpop.f32.mrb[0].mxu0
        %v1126 = vadd.f32 %v965, %v1125
        %v1127 = vpop.f32.mrb[0].mxu0
        %v1128 = vpop.f32.mrb[0].mxu0
        %v1129 = vadd.f32 %v968, %v1128
        %v1130 = vpop.f32.mrb[0].mxu0
        %1131 = vmatprep.mubr.bf16.mxu0 0
        %1132 = vmatmul.mubr.bf16.gmra.mrb[0].mxu0 %v675
        %v1133 = vpop.f32.mrb[0].mxu0
        %v1134 = vadd.f32 %v973, %v1133
        %v1135 = vpop.f32.mrb[0].mxu0
        %v1136 = vpop.f32.mrb[0].mxu0
        %v1137 = vadd.f32 %v976, %v1136
        %v1138 = vpop.f32.mrb[0].mxu0
        %1139 = vmatprep.mubr.bf16.mxu0 0
        %1140 = vmatmul.mubr.bf16.gmra.mrb[0].mxu0 %v678
        %v1141 = vpop.f32.mrb[0].mxu0
        %v1142 = vadd.f32 %v981, %v1141
        %v1143 = vpop.f32.mrb[0].mxu0
        %v1144 = vpop.f32.mrb[0].mxu0
        %v1145 = vadd.f32 %v984, %v1144
        %v1146 = vpop.f32.mrb[0].mxu0
        %1147 = vmatprep.mubr.bf16.mxu0 0
        %1148 = vmatmul.mubr.bf16.gmra.mrb[0].mxu0 %v681
        %v1149 = vpop.f32.mrb[0].mxu0
        %v1150 = vadd.f32 %v989, %v1149
        %v1151 = vpop.f32.mrb[0].mxu0
        %v1152 = vpop.f32.mrb[0].mxu0
        %v1153 = vadd.f32 %v992, %v1152
        %v1154 = vpop.f32.mrb[0].mxu0
        %1155 = vmatprep.mubr.bf16.mxu0 0
        %1156 = vmatmul.mubr.bf16.gmra.mrb[0].mxu0 %v684
        %v1157 = vpop.f32.mrb[0].mxu0
        %v1158 = vadd.f32 %v997, %v1157
        %v1159 = vpop.f32.mrb[0].mxu0
        %v1160 = vpop.f32.mrb[0].mxu0
        %v1161 = vadd.f32 %v1000, %v1160
        %v1162 = vpop.f32.mrb[0].mxu0
        %1163 = vmatprep.mubr.bf16.mxu0 0
        %1164 = vmatmul.mubr.bf16.gmra.mrb[0].mxu0 %v687
        %v1165 = vpop.f32.mrb[0].mxu0
        %v1166 = vadd.f32 %v1005, %v1165
        %v1167 = vpop.f32.mrb[0].mxu0
        %v1168 = vpop.f32.mrb[0].mxu0
        %v1169 = vadd.f32 %v1008, %v1168
        %v1170 = vpop.f32.mrb[0].mxu0
        %1171 = vmatprep.mubr.bf16.mxu0 0
        %1172 = vmatmul.mubr.bf16.gmra.mrb[0].mxu0 %v690
        %v1173 = vpop.f32.mrb[0].mxu0
        %v1174 = vadd.f32 %v1013, %v1173
        %v1175 = vpop.f32.mrb[0].mxu0
        %v1176 = vpop.f32.mrb[0].mxu0
        %v1177 = vadd.f32 %v1016, %v1176
        %v1178 = vpop.f32.mrb[0].mxu0
        %1179 = vmatprep.mubr.bf16.mxu0 0
        %1180 = vmatmul.mubr.bf16.gmra.mrb[0].mxu0 %v693
        %v1181 = vpop.f32.mrb[0].mxu0
        %v1182 = vadd.f32 %v1021, %v1181
        %v1183 = vpop.f32.mrb[0].mxu0
        %v1184 = vpop.f32.mrb[0].mxu0
        %v1185 = vadd.f32 %v1024, %v1184
        %v1186 = vpop.f32.mrb[0].mxu0
        %1187 = vmatprep.mubr.bf16.mxu0 0
        %1188 = vmatmul.mubr.bf16.gmra.mrb[0].mxu0 %v696
        %v1189 = vpop.f32.mrb[0].mxu0
        %v1190 = vadd.f32 %v1029, %v1189
        %v1191 = vpop.f32.mrb[0].mxu0
        %v1192 = vpop.f32.mrb[0].mxu0
        %v1193 = vadd.f32 %v1032, %v1192
        %v1194 = vpop.f32.mrb[0].mxu0
        %1195 = vmatprep.mubr.bf16.mxu0 0
        %1196 = vmatmul.mubr.bf16.gmra.mrb[0].mxu0 %v699
        %v1197 = vpop.f32.mrb[0].mxu0
        %v1198 = vadd.f32 %v1037, %v1197
        %v1199 = vpop.f32.mrb[0].mxu0
        %v1200 = vpop.f32.mrb[0].mxu0
        %v1201 = vadd.f32 %v1040, %v1200
        %v1202 = vpop.f32.mrb[0].mxu0
        %1203 = vmatprep.mubr.bf16.mxu0 0
        %1204 = vmatmul.mubr.bf16.gmra.mrb[0].mxu0 %v702
        %v1205 = vpop.f32.mrb[0].mxu0
        %v1206 = vadd.f32 %v1045, %v1205
        %v1207 = vpop.f32.mrb[0].mxu0
        %v1208 = vpop.f32.mrb[0].mxu0
        %v1209 = vadd.f32 %v1048, %v1208
        %v1210 = vpop.f32.mrb[0].mxu0
        %1211 = vmatprep.mubr.bf16.mxu0 0
        %1212 = vmatmul.mubr.bf16.gmra.mrb[0].mxu0 %v705
        %v1213 = vpop.f32.mrb[0].mxu0
        %v1214 = vadd.f32 %v1053, %v1213
        %v1215 = vpop.f32.mrb[0].mxu0
        %v1216 = vpop.f32.mrb[0].mxu0
        %v1217 = vadd.f32 %v1056, %v1216
        %v1218 = vpop.f32.mrb[0].mxu0
        %1219 = vdwg.mxu0
        %v1220 = vld [vmem:[%s2] sm:$0x1]
        %v1222 = vlaneseq
        %v1223 = vshrl.u32 %v1222, 7
        %v1224 = vsub.s32 0, %v1223
        %v1225 = vrot.slane %v1220, %v1224
        %v1227 = vmul.f32 %v1094, %v1225
        %v1228 = vmul.f32 %v1097, %v1225
        %v1229 = vmul.f32 %v1102, %v1225
        %v1230 = vmul.f32 %v1105, %v1225
        %v1231 = vmul.f32 %v1110, %v1225
        %v1232 = vmul.f32 %v1113, %v1225
        %v1233 = vmul.f32 %v1118, %v1225
        %v1234 = vmul.f32 %v1121, %v1225
        %v1235 = vmul.f32 %v1126, %v1225
        %v1236 = vmul.f32 %v1129, %v1225
        %v1237 = vmul.f32 %v1134, %v1225
        %v1238 = vmul.f32 %v1137, %v1225
        %v1239 = vmul.f32 %v1142, %v1225
        %v1240 = vmul.f32 %v1145, %v1225
        %v1241 = vmul.f32 %v1150, %v1225
        %v1242 = vmul.f32 %v1153, %v1225
        %v1243 = vmul.f32 %v1158, %v1225
        %v1244 = vmul.f32 %v1161, %v1225
        %v1245 = vmul.f32 %v1166, %v1225
        %v1246 = vmul.f32 %v1169, %v1225
        %v1247 = vmul.f32 %v1174, %v1225
        %v1248 = vmul.f32 %v1177, %v1225
        %v1249 = vmul.f32 %v1182, %v1225
        %v1250 = vmul.f32 %v1185, %v1225
        %v1251 = vmul.f32 %v1190, %v1225
        %v1252 = vmul.f32 %v1193, %v1225
        %v1253 = vmul.f32 %v1198, %v1225
        %v1254 = vmul.f32 %v1201, %v1225
        %v1255 = vmul.f32 %v1206, %v1225
        %v1256 = vmul.f32 %v1209, %v1225
        %v1257 = vmul.f32 %v1214, %v1225
        %v1258 = vmul.f32 %v1217, %v1225
        %v1259 = vld [vmem:[%s3] sm:$0x1]
        %v1261 = vlaneseq
        %v1262 = vshrl.u32 %v1261, 7
        %v1263 = vsub.s32 0, %v1262
        %v1264 = vrot.slane %v1259, %v1263
        %v1266 = vadd.f32 %v1227, %v1264
        %v1267 = vadd.f32 %v1228, %v1264
        %v1268 = vadd.f32 %v1229, %v1264
        %v1269 = vadd.f32 %v1230, %v1264
        %v1270 = vadd.f32 %v1231, %v1264
        %v1271 = vadd.f32 %v1232, %v1264
        %v1272 = vadd.f32 %v1233, %v1264
        %v1273 = vadd.f32 %v1234, %v1264
        %v1274 = vadd.f32 %v1235, %v1264
        %v1275 = vadd.f32 %v1236, %v1264
        %v1276 = vadd.f32 %v1237, %v1264
        %v1277 = vadd.f32 %v1238, %v1264
        %v1278 = vadd.f32 %v1239, %v1264
        %v1279 = vadd.f32 %v1240, %v1264
        %v1280 = vadd.f32 %v1241, %v1264
        %v1281 = vadd.f32 %v1242, %v1264
        %v1282 = vadd.f32 %v1243, %v1264
        %v1283 = vadd.f32 %v1244, %v1264
        %v1284 = vadd.f32 %v1245, %v1264
        %v1285 = vadd.f32 %v1246, %v1264
        %v1286 = vadd.f32 %v1247, %v1264
        %v1287 = vadd.f32 %v1248, %v1264
        %v1288 = vadd.f32 %v1249, %v1264
        %v1289 = vadd.f32 %v1250, %v1264
        %v1290 = vadd.f32 %v1251, %v1264
        %v1291 = vadd.f32 %v1252, %v1264
        %v1292 = vadd.f32 %v1253, %v1264
        %v1293 = vadd.f32 %v1254, %v1264
        %v1294 = vadd.f32 %v1255, %v1264
        %v1295 = vadd.f32 %v1256, %v1264
        %v1296 = vadd.f32 %v1257, %v1264
        %v1297 = vadd.f32 %v1258, %v1264
        %v1298 = vmax.f32 %v1266, 0.0
        %v1299 = vmax.f32 %v1267, 0.0
        %v1300 = vmax.f32 %v1268, 0.0
        %v1301 = vmax.f32 %v1269, 0.0
        %v1302 = vmax.f32 %v1270, 0.0
        %v1303 = vmax.f32 %v1271, 0.0
        %v1304 = vmax.f32 %v1272, 0.0
        %v1305 = vmax.f32 %v1273, 0.0
        %v1306 = vmax.f32 %v1274, 0.0
        %v1307 = vmax.f32 %v1275, 0.0
        %v1308 = vmax.f32 %v1276, 0.0
        %v1309 = vmax.f32 %v1277, 0.0
        %v1310 = vmax.f32 %v1278, 0.0
        %v1311 = vmax.f32 %v1279, 0.0
        %v1312 = vmax.f32 %v1280, 0.0
        %v1313 = vmax.f32 %v1281, 0.0
        %v1314 = vmax.f32 %v1282, 0.0
        %v1315 = vmax.f32 %v1283, 0.0
        %v1316 = vmax.f32 %v1284, 0.0
        %v1317 = vmax.f32 %v1285, 0.0
        %v1318 = vmax.f32 %v1286, 0.0
        %v1319 = vmax.f32 %v1287, 0.0
        %v1320 = vmax.f32 %v1288, 0.0
        %v1321 = vmax.f32 %v1289, 0.0
        %v1322 = vmax.f32 %v1290, 0.0
        %v1323 = vmax.f32 %v1291, 0.0
        %v1324 = vmax.f32 %v1292, 0.0
        %v1325 = vmax.f32 %v1293, 0.0
        %v1326 = vmax.f32 %v1294, 0.0
        %v1327 = vmax.f32 %v1295, 0.0
        %v1328 = vmax.f32 %v1296, 0.0
        %v1329 = vmax.f32 %v1297, 0.0
        %v1330 = vrot.slane %v1298, 7
        %v1331 = vrot.slane %v1299, 7
        %v1332 = vrot.slane %v1300, 7
        %v1333 = vrot.slane %v1301, 7
        %v1334 = vrot.slane %v1302, 7
        %v1335 = vrot.slane %v1303, 7
        %v1336 = vrot.slane %v1304, 7
        %v1337 = vrot.slane %v1305, 7
        %v1338 = vrot.slane %v1306, 7
        %v1339 = vrot.slane %v1307, 7
        %v1340 = vrot.slane %v1308, 7
        %v1341 = vrot.slane %v1309, 7
        %v1342 = vrot.slane %v1310, 7
        %v1343 = vrot.slane %v1311, 7
        %v1344 = vrot.slane %v1312, 7
        %v1345 = vrot.slane %v1313, 7
        %v1346 = vrot.slane %v1314, 7
        %v1347 = vrot.slane %v1315, 7
        %v1348 = vrot.slane %v1316, 7
        %v1349 = vrot.slane %v1317, 7
        %v1350 = vrot.slane %v1318, 7
        %v1351 = vrot.slane %v1319, 7
        %v1352 = vrot.slane %v1320, 7
        %v1353 = vrot.slane %v1321, 7
        %v1354 = vrot.slane %v1322, 7
        %v1355 = vrot.slane %v1323, 7
        %v1356 = vrot.slane %v1324, 7
        %v1357 = vrot.slane %v1325, 7
        %v1358 = vrot.slane %v1326, 7
        %v1359 = vrot.slane %v1327, 7
        %v1360 = vrot.slane %v1328, 7
        %v1361 = vrot.slane %v1329, 7
        %v1362 = vsel %vm400, %v1360, %v1361
        %v1363 = vsel %vm400, %v1359, %v1360
        %v1364 = vsel %vm400, %v1358, %v1359
        %v1365 = vsel %vm400, %v1357, %v1358
        %v1366 = vsel %vm400, %v1356, %v1357
        %v1367 = vsel %vm400, %v1355, %v1356
        %v1368 = vsel %vm400, %v1354, %v1355
        %v1369 = vsel %vm400, %v1353, %v1354
        %v1370 = vsel %vm400, %v1352, %v1353
        %v1371 = vsel %vm400, %v1351, %v1352
        %v1372 = vsel %vm400, %v1350, %v1351
        %v1373 = vsel %vm400, %v1349, %v1350
        %v1374 = vsel %vm400, %v1348, %v1349
        %v1375 = vsel %vm400, %v1347, %v1348
        %v1376 = vsel %vm400, %v1346, %v1347
        %v1377 = vsel %vm400, %v1345, %v1346
        %v1378 = vsel %vm400, %v1344, %v1345
        %v1379 = vsel %vm400, %v1343, %v1344
        %v1380 = vsel %vm400, %v1342, %v1343
        %v1381 = vsel %vm400, %v1341, %v1342
        %v1382 = vsel %vm400, %v1340, %v1341
        %v1383 = vsel %vm400, %v1339, %v1340
        %v1384 = vsel %vm400, %v1338, %v1339
        %v1385 = vsel %vm400, %v1337, %v1338
        %v1386 = vsel %vm400, %v1336, %v1337
        %v1387 = vsel %vm400, %v1335, %v1336
        %v1388 = vsel %vm400, %v1334, %v1335
        %v1389 = vsel %vm400, %v1333, %v1334
        %v1390 = vsel %vm400, %v1332, %v1333
        %v1391 = vsel %vm400, %v1331, %v1332
        %v1392 = vsel %vm400, %v1330, %v1331
        %v1393 = vsel %vm400, %v1361, %v1330
        %v1394 = vsel %vm364, %v1393, 0.0
        %v1395 = vsel %vm365, %v1392, 0.0
        %v1396 = vsel %vm364, %v1391, 0.0
        %v1397 = vsel %vm365, %v1390, 0.0
        %v1398 = vsel %vm364, %v1389, 0.0
        %v1399 = vsel %vm365, %v1388, 0.0
        %v1400 = vsel %vm364, %v1387, 0.0
        %v1401 = vsel %vm365, %v1386, 0.0
        %v1402 = vsel %vm364, %v1385, 0.0
        %v1403 = vsel %vm365, %v1384, 0.0
        %v1404 = vsel %vm364, %v1383, 0.0
        %v1405 = vsel %vm365, %v1382, 0.0
        %v1406 = vsel %vm364, %v1381, 0.0
        %v1407 = vsel %vm365, %v1380, 0.0
        %v1408 = vsel %vm364, %v1379, 0.0
        %v1409 = vsel %vm365, %v1378, 0.0
        %v1410 = vsel %vm364, %v1377, 0.0
        %v1411 = vsel %vm365, %v1376, 0.0
        %v1412 = vsel %vm364, %v1375, 0.0
        %v1413 = vsel %vm365, %v1374, 0.0
        %v1414 = vsel %vm364, %v1373, 0.0
        %v1415 = vsel %vm365, %v1372, 0.0
        %v1416 = vsel %vm364, %v1371, 0.0
        %v1417 = vsel %vm365, %v1370, 0.0
        %v1418 = vsel %vm364, %v1369, 0.0
        %v1419 = vsel %vm365, %v1368, 0.0
        %v1420 = vsel %vm364, %v1367, 0.0
        %v1421 = vsel %vm365, %v1366, 0.0
        %v1422 = vsel %vm364, %v1365, 0.0
        %v1423 = vsel %vm365, %v1364, 0.0
        %v1424 = vsel %vm364, %v1363, 0.0
        %v1425 = vsel %vm365, %v1362, 0.0
        %v1426 = vrot.slane %v1298, 1
        %v1427 = vrot.slane %v1299, 1
        %v1428 = vrot.slane %v1300, 1
        %v1429 = vrot.slane %v1301, 1
        %v1430 = vrot.slane %v1302, 1
        %v1431 = vrot.slane %v1303, 1
        %v1432 = vrot.slane %v1304, 1
        %v1433 = vrot.slane %v1305, 1
        %v1434 = vrot.slane %v1306, 1
        %v1435 = vrot.slane %v1307, 1
        %v1436 = vrot.slane %v1308, 1
        %v1437 = vrot.slane %v1309, 1
        %v1438 = vrot.slane %v1310, 1
        %v1439 = vrot.slane %v1311, 1
        %v1440 = vrot.slane %v1312, 1
        %v1441 = vrot.slane %v1313, 1
        %v1442 = vrot.slane %v1314, 1
        %v1443 = vrot.slane %v1315, 1
        %v1444 = vrot.slane %v1316, 1
        %v1445 = vrot.slane %v1317, 1
        %v1446 = vrot.slane %v1318, 1
        %v1447 = vrot.slane %v1319, 1
        %v1448 = vrot.slane %v1320, 1
        %v1449 = vrot.slane %v1321, 1
        %v1450 = vrot.slane %v1322, 1
        %v1451 = vrot.slane %v1323, 1
        %v1452 = vrot.slane %v1324, 1
        %v1453 = vrot.slane %v1325, 1
        %v1454 = vrot.slane %v1326, 1
        %v1455 = vrot.slane %v1327, 1
        %v1456 = vrot.slane %v1328, 1
        %v1457 = vrot.slane %v1329, 1
        %v1458 = vsel %vm497, %v1456, %v1457
        %v1459 = vsel %vm497, %v1455, %v1456
        %v1460 = vsel %vm497, %v1454, %v1455
        %v1461 = vsel %vm497, %v1453, %v1454
        %v1462 = vsel %vm497, %v1452, %v1453
        %v1463 = vsel %vm497, %v1451, %v1452
        %v1464 = vsel %vm497, %v1450, %v1451
        %v1465 = vsel %vm497, %v1449, %v1450
        %v1466 = vsel %vm497, %v1448, %v1449
        %v1467 = vsel %vm497, %v1447, %v1448
        %v1468 = vsel %vm497, %v1446, %v1447
        %v1469 = vsel %vm497, %v1445, %v1446
        %v1470 = vsel %vm497, %v1444, %v1445
        %v1471 = vsel %vm497, %v1443, %v1444
        %v1472 = vsel %vm497, %v1442, %v1443
        %v1473 = vsel %vm497, %v1441, %v1442
        %v1474 = vsel %vm497, %v1440, %v1441
        %v1475 = vsel %vm497, %v1439, %v1440
        %v1476 = vsel %vm497, %v1438, %v1439
        %v1477 = vsel %vm497, %v1437, %v1438
        %v1478 = vsel %vm497, %v1436, %v1437
        %v1479 = vsel %vm497, %v1435, %v1436
        %v1480 = vsel %vm497, %v1434, %v1435
        %v1481 = vsel %vm497, %v1433, %v1434
        %v1482 = vsel %vm497, %v1432, %v1433
        %v1483 = vsel %vm497, %v1431, %v1432
        %v1484 = vsel %vm497, %v1430, %v1431
        %v1485 = vsel %vm497, %v1429, %v1430
        %v1486 = vsel %vm497, %v1428, %v1429
        %v1487 = vsel %vm497, %v1427, %v1428
        %v1488 = vsel %vm497, %v1426, %v1427
        %v1489 = vsel %vm497, %v1457, %v1426
        %v1490 = vsel %vm366, %v1488, 0.0
        %v1491 = vsel %vm367, %v1487, 0.0
        %v1492 = vsel %vm366, %v1486, 0.0
        %v1493 = vsel %vm367, %v1485, 0.0
        %v1494 = vsel %vm366, %v1484, 0.0
        %v1495 = vsel %vm367, %v1483, 0.0
        %v1496 = vsel %vm366, %v1482, 0.0
        %v1497 = vsel %vm367, %v1481, 0.0
        %v1498 = vsel %vm366, %v1480, 0.0
        %v1499 = vsel %vm367, %v1479, 0.0
        %v1500 = vsel %vm366, %v1478, 0.0
        %v1501 = vsel %vm367, %v1477, 0.0
        %v1502 = vsel %vm366, %v1476, 0.0
        %v1503 = vsel %vm367, %v1475, 0.0
        %v1504 = vsel %vm366, %v1474, 0.0
        %v1505 = vsel %vm367, %v1473, 0.0
        %v1506 = vsel %vm366, %v1472, 0.0
        %v1507 = vsel %vm367, %v1471, 0.0
        %v1508 = vsel %vm366, %v1470, 0.0
        %v1509 = vsel %vm367, %v1469, 0.0
        %v1510 = vsel %vm366, %v1468, 0.0
        %v1511 = vsel %vm367, %v1467, 0.0
        %v1512 = vsel %vm366, %v1466, 0.0
        %v1513 = vsel %vm367, %v1465, 0.0
        %v1514 = vsel %vm366, %v1464, 0.0
        %v1515 = vsel %vm367, %v1463, 0.0
        %v1516 = vsel %vm366, %v1462, 0.0
        %v1517 = vsel %vm367, %v1461, 0.0
        %v1518 = vsel %vm366, %v1460, 0.0
        %v1519 = vsel %vm367, %v1459, 0.0
        %v1520 = vsel %vm366, %v1458, 0.0
        %v1521 = vsel %vm367, %v1489, 0.0
        %v1522 = vpack.c.bf16 %v1395, %v1394
        %v1523 = vpack.c.bf16 %v1397, %v1396
        %v1524 = vpack.c.bf16 %v1399, %v1398
        %v1525 = vpack.c.bf16 %v1401, %v1400
        %v1526 = vpack.c.bf16 %v1403, %v1402
        %v1527 = vpack.c.bf16 %v1405, %v1404
        %v1528 = vpack.c.bf16 %v1407, %v1406
        %v1529 = vpack.c.bf16 %v1409, %v1408
        %v1530 = vpack.c.bf16 %v1411, %v1410
        %v1531 = vpack.c.bf16 %v1413, %v1412
        %v1532 = vpack.c.bf16 %v1415, %v1414
        %v1533 = vpack.c.bf16 %v1417, %v1416
        %v1534 = vpack.c.bf16 %v1419, %v1418
        %v1535 = vpack.c.bf16 %v1421, %v1420
        %v1536 = vpack.c.bf16 %v1423, %v1422
        %v1537 = vpack.c.bf16 %v1425, %v1424
        %1538 = vst [vmem:[#allocation2] sm:$0xff] %v1522
        %1539 = vst [vmem:[#allocation2 + $0x18] sm:$0xff] %v1523
        %1540 = vst [vmem:[#allocation2 + $0x30] sm:$0xff] %v1524
        %1541 = vst [vmem:[#allocation2 + $0x48] sm:$0xff] %v1525
        %1542 = vst [vmem:[#allocation2 + $0x60] sm:$0xff] %v1526
        %1543 = vst [vmem:[#allocation2 + $0x78] sm:$0xff] %v1527
        %1544 = vst [vmem:[#allocation2 + $0x90] sm:$0xff] %v1528
        %1545 = vst [vmem:[#allocation2 + $0xa8] sm:$0xff] %v1529
        %1546 = vst [vmem:[#allocation2 + $0xc0] sm:$0xff] %v1530
        %1547 = vst [vmem:[#allocation2 + $0xd8] sm:$0xff] %v1531
        %1548 = vst [vmem:[#allocation2 + $0xf0] sm:$0xff] %v1532
        %1549 = vst [vmem:[#allocation2 + $0x108] sm:$0xff] %v1533
        %1550 = vst [vmem:[#allocation2 + $0x120] sm:$0xff] %v1534
        %1551 = vst [vmem:[#allocation2 + $0x138] sm:$0xff] %v1535
        %1552 = vst [vmem:[#allocation2 + $0x150] sm:$0xff] %v1536
        %1553 = vst [vmem:[#allocation2 + $0x168] sm:$0xff] %v1537
        %v1554 = vpack.c.bf16 %v1299, %v1298
        %v1555 = vpack.c.bf16 %v1301, %v1300
        %v1556 = vpack.c.bf16 %v1303, %v1302
        %v1557 = vpack.c.bf16 %v1305, %v1304
        %v1558 = vpack.c.bf16 %v1307, %v1306
        %v1559 = vpack.c.bf16 %v1309, %v1308
        %v1560 = vpack.c.bf16 %v1311, %v1310
        %v1561 = vpack.c.bf16 %v1313, %v1312
        %v1562 = vpack.c.bf16 %v1315, %v1314
        %v1563 = vpack.c.bf16 %v1317, %v1316
        %v1564 = vpack.c.bf16 %v1319, %v1318
        %v1565 = vpack.c.bf16 %v1321, %v1320
        %v1566 = vpack.c.bf16 %v1323, %v1322
        %v1567 = vpack.c.bf16 %v1325, %v1324
        %v1568 = vpack.c.bf16 %v1327, %v1326
        %v1569 = vpack.c.bf16 %v1329, %v1328
        %1570 = vst [vmem:[#allocation2 + $0x8] sm:$0xff] %v1554
        %1571 = vst [vmem:[#allocation2 + $0x20] sm:$0xff] %v1555
        %1572 = vst [vmem:[#allocation2 + $0x38] sm:$0xff] %v1556
        %1573 = vst [vmem:[#allocation2 + $0x50] sm:$0xff] %v1557
        %1574 = vst [vmem:[#allocation2 + $0x68] sm:$0xff] %v1558
        %1575 = vst [vmem:[#allocation2 + $0x80] sm:$0xff] %v1559
        %1576 = vst [vmem:[#allocation2 + $0x98] sm:$0xff] %v1560
        %1577 = vst [vmem:[#allocation2 + $0xb0] sm:$0xff] %v1561
        %1578 = vst [vmem:[#allocation2 + $0xc8] sm:$0xff] %v1562
        %1579 = vst [vmem:[#allocation2 + $0xe0] sm:$0xff] %v1563
        %1580 = vst [vmem:[#allocation2 + $0xf8] sm:$0xff] %v1564
        %1581 = vst [vmem:[#allocation2 + $0x110] sm:$0xff] %v1565
        %1582 = vst [vmem:[#allocation2 + $0x128] sm:$0xff] %v1566
        %1583 = vst [vmem:[#allocation2 + $0x140] sm:$0xff] %v1567
        %1584 = vst [vmem:[#allocation2 + $0x158] sm:$0xff] %v1568
        %1585 = vst [vmem:[#allocation2 + $0x170] sm:$0xff] %v1569
        %v1586 = vpack.c.bf16 %v1491, %v1490
        %v1587 = vpack.c.bf16 %v1493, %v1492
        %v1588 = vpack.c.bf16 %v1495, %v1494
        %v1589 = vpack.c.bf16 %v1497, %v1496
        %v1590 = vpack.c.bf16 %v1499, %v1498
        %v1591 = vpack.c.bf16 %v1501, %v1500
        %v1592 = vpack.c.bf16 %v1503, %v1502
        %v1593 = vpack.c.bf16 %v1505, %v1504
        %v1594 = vpack.c.bf16 %v1507, %v1506
        %v1595 = vpack.c.bf16 %v1509, %v1508
        %v1596 = vpack.c.bf16 %v1511, %v1510
        %v1597 = vpack.c.bf16 %v1513, %v1512
        %v1598 = vpack.c.bf16 %v1515, %v1514
        %v1599 = vpack.c.bf16 %v1517, %v1516
        %v1600 = vpack.c.bf16 %v1519, %v1518
        %v1601 = vpack.c.bf16 %v1521, %v1520
        %1602 = vst [vmem:[#allocation2 + $0x10] sm:$0xff] %v1586
        %1603 = vst [vmem:[#allocation2 + $0x28] sm:$0xff] %v1587
        %1604 = vst [vmem:[#allocation2 + $0x40] sm:$0xff] %v1588
        %1605 = vst [vmem:[#allocation2 + $0x58] sm:$0xff] %v1589
        %1606 = vst [vmem:[#allocation2 + $0x70] sm:$0xff] %v1590
        %1607 = vst [vmem:[#allocation2 + $0x88] sm:$0xff] %v1591
        %1608 = vst [vmem:[#allocation2 + $0xa0] sm:$0xff] %v1592
        %1609 = vst [vmem:[#allocation2 + $0xb8] sm:$0xff] %v1593
        %1610 = vst [vmem:[#allocation2 + $0xd0] sm:$0xff] %v1594
        %1611 = vst [vmem:[#allocation2 + $0xe8] sm:$0xff] %v1595
        %1612 = vst [vmem:[#allocation2 + $0x100] sm:$0xff] %v1596
        %1613 = vst [vmem:[#allocation2 + $0x118] sm:$0xff] %v1597
        %1614 = vst [vmem:[#allocation2 + $0x130] sm:$0xff] %v1598
        %1615 = vst [vmem:[#allocation2 + $0x148] sm:$0xff] %v1599
        %1616 = vst [vmem:[#allocation2 + $0x160] sm:$0xff] %v1600
        %1617 = vst [vmem:[#allocation2 + $0x178] sm:$0xff] %v1601
        %v1618 = vld [vmem:[#allocation2] sm:$0xff]
        %v1619 = vld [vmem:[#allocation2 + $0x8] sm:$0xff]
        %v1620 = vld [vmem:[#allocation2 + $0x10] sm:$0xff]
        %v1621 = vld [vmem:[#allocation2 + $0x18] sm:$0xff]
        %v1622 = vld [vmem:[#allocation2 + $0x20] sm:$0xff]
        %v1623 = vld [vmem:[#allocation2 + $0x28] sm:$0xff]
        %v1624 = vld [vmem:[#allocation2 + $0x30] sm:$0xff]
        %v1625 = vld [vmem:[#allocation2 + $0x38] sm:$0xff]
        %v1626 = vld [vmem:[#allocation2 + $0x40] sm:$0xff]
        %v1627 = vld [vmem:[#allocation2 + $0x48] sm:$0xff]
        %v1628 = vld [vmem:[#allocation2 + $0x50] sm:$0xff]
        %v1629 = vld [vmem:[#allocation2 + $0x58] sm:$0xff]
        %v1630 = vld [vmem:[#allocation2 + $0x60] sm:$0xff]
        %v1631 = vld [vmem:[#allocation2 + $0x68] sm:$0xff]
        %v1632 = vld [vmem:[#allocation2 + $0x70] sm:$0xff]
        %v1633 = vld [vmem:[#allocation2 + $0x78] sm:$0xff]
        %v1634 = vld [vmem:[#allocation2 + $0x80] sm:$0xff]
        %v1635 = vld [vmem:[#allocation2 + $0x88] sm:$0xff]
        %v1636 = vld [vmem:[#allocation2 + $0x90] sm:$0xff]
        %v1637 = vld [vmem:[#allocation2 + $0x98] sm:$0xff]
        %v1638 = vld [vmem:[#allocation2 + $0xa0] sm:$0xff]
        %v1639 = vld [vmem:[#allocation2 + $0xa8] sm:$0xff]
        %v1640 = vld [vmem:[#allocation2 + $0xb0] sm:$0xff]
        %v1641 = vld [vmem:[#allocation2 + $0xb8] sm:$0xff]
        %v1642 = vld [vmem:[#allocation2 + $0xc0] sm:$0xff]
        %v1643 = vld [vmem:[#allocation2 + $0xc8] sm:$0xff]
        %v1644 = vld [vmem:[#allocation2 + $0xd0] sm:$0xff]
        %v1645 = vld [vmem:[#allocation2 + $0xd8] sm:$0xff]
        %v1646 = vld [vmem:[#allocation2 + $0xe0] sm:$0xff]
        %v1647 = vld [vmem:[#allocation2 + $0xe8] sm:$0xff]
        %v1648 = vld [vmem:[#allocation2 + $0xf0] sm:$0xff]
        %v1649 = vld [vmem:[#allocation2 + $0xf8] sm:$0xff]
        %v1650 = vld [vmem:[#allocation2 + $0x100] sm:$0xff]
        %v1651 = vld [vmem:[#allocation2 + $0x108] sm:$0xff]
        %v1652 = vld [vmem:[#allocation2 + $0x110] sm:$0xff]
        %v1653 = vld [vmem:[#allocation2 + $0x118] sm:$0xff]
        %v1654 = vld [vmem:[#allocation2 + $0x120] sm:$0xff]
        %v1655 = vld [vmem:[#allocation2 + $0x128] sm:$0xff]
        %v1656 = vld [vmem:[#allocation2 + $0x130] sm:$0xff]
        %v1657 = vld [vmem:[#allocation2 + $0x138] sm:$0xff]
        %v1658 = vld [vmem:[#allocation2 + $0x140] sm:$0xff]
        %v1659 = vld [vmem:[#allocation2 + $0x148] sm:$0xff]
        %v1660 = vld [vmem:[#allocation2 + $0x150] sm:$0xff]
        %v1661 = vld [vmem:[#allocation2 + $0x158] sm:$0xff]
        %v1662 = vld [vmem:[#allocation2 + $0x160] sm:$0xff]
        %v1663 = vld [vmem:[#allocation2 + $0x168] sm:$0xff]
        %v1664 = vld [vmem:[#allocation2 + $0x170] sm:$0xff]
        %v1665 = vld [vmem:[#allocation2 + $0x178] sm:$0xff]
        %v1666 = vld [vmem:[#allocation8] sm:$0xf]
        %v1667 = vld [vmem:[#allocation8 + $0x4] sm:$0xf]
        %v1668 = vld [vmem:[#allocation8 + $0x8] sm:$0xf]
        %v1669 = vld [vmem:[#allocation8 + $0xc] sm:$0xf]
        %v1670 = vld [vmem:[#allocation8 + $0x10] sm:$0xf]
        %v1671 = vld [vmem:[#allocation8 + $0x14] sm:$0xf]
        %v1672 = vld [vmem:[#allocation8 + $0x18] sm:$0xf]
        %v1673 = vld [vmem:[#allocation8 + $0x1c] sm:$0xf]
        %v1674 = vld [vmem:[#allocation8 + $0x20] sm:$0xf]
        %v1675 = vld [vmem:[#allocation8 + $0x24] sm:$0xf]
        %v1676 = vld [vmem:[#allocation8 + $0x28] sm:$0xf]
        %v1677 = vld [vmem:[#allocation8 + $0x2c] sm:$0xf]
        %v1678 = vld [vmem:[#allocation8 + $0x30] sm:$0xf]
        %v1679 = vld [vmem:[#allocation8 + $0x34] sm:$0xf]
        %v1680 = vld [vmem:[#allocation8 + $0x38] sm:$0xf]
        %v1681 = vld [vmem:[#allocation8 + $0x3c] sm:$0xf]
        %v1682 = vld [vmem:[#allocation8 + $0x40] sm:$0xf]
        %v1683 = vld [vmem:[#allocation8 + $0x44] sm:$0xf]
        %v1684 = vld [vmem:[#allocation8 + $0x48] sm:$0xf]
        %v1685 = vld [vmem:[#allocation8 + $0x4c] sm:$0xf]
        %v1686 = vld [vmem:[#allocation8 + $0x50] sm:$0xf]
        %v1687 = vld [vmem:[#allocation8 + $0x54] sm:$0xf]
        %v1688 = vld [vmem:[#allocation8 + $0x58] sm:$0xf]
        %v1689 = vld [vmem:[#allocation8 + $0x5c] sm:$0xf]
        %v1690 = vld [vmem:[#allocation8 + $0x60] sm:$0xf]
        %v1691 = vld [vmem:[#allocation8 + $0x64] sm:$0xf]
        %v1692 = vld [vmem:[#allocation8 + $0x68] sm:$0xf]
        %v1693 = vld [vmem:[#allocation8 + $0x6c] sm:$0xf]
        %v1694 = vld [vmem:[#allocation8 + $0x70] sm:$0xf]
        %v1695 = vld [vmem:[#allocation8 + $0x74] sm:$0xf]
        %v1696 = vld [vmem:[#allocation8 + $0x78] sm:$0xf]
        %v1697 = vld [vmem:[#allocation8 + $0x7c] sm:$0xf]
        %v1698 = vld [vmem:[#allocation8 + $0x80] sm:$0xf]
        %v1699 = vld [vmem:[#allocation8 + $0x84] sm:$0xf]
        %v1700 = vld [vmem:[#allocation8 + $0x88] sm:$0xf]
        %v1701 = vld [vmem:[#allocation8 + $0x8c] sm:$0xf]
        %v1702 = vld [vmem:[#allocation8 + $0x90] sm:$0xf]
        %v1703 = vld [vmem:[#allocation8 + $0x94] sm:$0xf]
        %v1704 = vld [vmem:[#allocation8 + $0x98] sm:$0xf]
        %v1705 = vld [vmem:[#allocation8 + $0x9c] sm:$0xf]
        %v1706 = vld [vmem:[#allocation8 + $0xa0] sm:$0xf]
        %v1707 = vld [vmem:[#allocation8 + $0xa4] sm:$0xf]
        %v1708 = vld [vmem:[#allocation8 + $0xa8] sm:$0xf]
        %v1709 = vld [vmem:[#allocation8 + $0xac] sm:$0xf]
        %v1710 = vld [vmem:[#allocation8 + $0xb0] sm:$0xf]
        %v1711 = vld [vmem:[#allocation8 + $0xb4] sm:$0xf]
        %v1712 = vld [vmem:[#allocation8 + $0xb8] sm:$0xf]
        %v1713 = vld [vmem:[#allocation8 + $0xbc] sm:$0xf]
        %v1762 = vunpack.c.l.b16 %v1666
        %v1763 = vunpack.c.l.b16 %v1667
        %v1764 = vunpack.c.l.b16 %v1668
        %v1765 = vunpack.c.l.b16 %v1669
        %v1766 = vunpack.c.l.b16 %v1670
        %v1767 = vunpack.c.l.b16 %v1671
        %v1768 = vunpack.c.l.b16 %v1672
        %v1769 = vunpack.c.l.b16 %v1673
        %v1770 = vunpack.c.l.b16 %v1674
        %v1771 = vunpack.c.l.b16 %v1675
        %v1772 = vunpack.c.l.b16 %v1676
        %v1773 = vunpack.c.l.b16 %v1677
        %v1774 = vunpack.c.l.b16 %v1678
        %v1775 = vunpack.c.l.b16 %v1679
        %v1776 = vunpack.c.l.b16 %v1680
        %v1777 = vunpack.c.l.b16 %v1681
        %v1778 = vunpack.c.l.b16 %v1682
        %v1779 = vunpack.c.l.b16 %v1683
        %v1780 = vunpack.c.l.b16 %v1684
        %v1781 = vunpack.c.l.b16 %v1685
        %v1782 = vunpack.c.l.b16 %v1686
        %v1783 = vunpack.c.l.b16 %v1687
        %v1784 = vunpack.c.l.b16 %v1688
        %v1785 = vunpack.c.l.b16 %v1689
        %v1786 = vunpack.c.l.b16 %v1690
        %v1787 = vunpack.c.l.b16 %v1691
        %v1788 = vunpack.c.l.b16 %v1692
        %v1789 = vunpack.c.l.b16 %v1693
        %v1790 = vunpack.c.l.b16 %v1694
        %v1791 = vunpack.c.l.b16 %v1695
        %v1792 = vunpack.c.l.b16 %v1696
        %v1793 = vunpack.c.l.b16 %v1697
        %v1794 = vunpack.c.l.b16 %v1698
        %v1795 = vunpack.c.l.b16 %v1699
        %v1796 = vunpack.c.l.b16 %v1700
        %v1797 = vunpack.c.l.b16 %v1701
        %v1798 = vunpack.c.l.b16 %v1702
        %v1799 = vunpack.c.l.b16 %v1703
        %v1800 = vunpack.c.l.b16 %v1704
        %v1801 = vunpack.c.l.b16 %v1705
        %v1802 = vunpack.c.l.b16 %v1706
        %v1803 = vunpack.c.l.b16 %v1707
        %v1804 = vunpack.c.l.b16 %v1708
        %v1805 = vunpack.c.l.b16 %v1709
        %v1806 = vunpack.c.l.b16 %v1710
        %v1807 = vunpack.c.l.b16 %v1711
        %v1808 = vunpack.c.l.b16 %v1712
        %v1809 = vunpack.c.l.b16 %v1713
        %v1810 = vpack.c.b16 %v1763, %v1762
        %v1811 = vpack.c.b16 %v1765, %v1764
        %v1812 = vpack.c.b16 %v1767, %v1766
        %v1813 = vpack.c.b16 %v1769, %v1768
        %v1814 = vpack.c.b16 %v1771, %v1770
        %v1815 = vpack.c.b16 %v1773, %v1772
        %v1816 = vpack.c.b16 %v1775, %v1774
        %v1817 = vpack.c.b16 %v1777, %v1776
        %v1818 = vpack.c.b16 %v1779, %v1778
        %v1819 = vpack.c.b16 %v1781, %v1780
        %v1820 = vpack.c.b16 %v1783, %v1782
        %v1821 = vpack.c.b16 %v1785, %v1784
        %v1822 = vpack.c.b16 %v1787, %v1786
        %v1823 = vpack.c.b16 %v1789, %v1788
        %v1824 = vpack.c.b16 %v1791, %v1790
        %v1825 = vpack.c.b16 %v1793, %v1792
        %v1826 = vpack.c.b16 %v1795, %v1794
        %v1827 = vpack.c.b16 %v1797, %v1796
        %v1828 = vpack.c.b16 %v1799, %v1798
        %v1829 = vpack.c.b16 %v1801, %v1800
        %v1830 = vpack.c.b16 %v1803, %v1802
        %v1831 = vpack.c.b16 %v1805, %v1804
        %v1832 = vpack.c.b16 %v1807, %v1806
        %v1833 = vpack.c.b16 %v1809, %v1808
        %1858 = vmatprep.subr.bf16.mxu0 0
        %1859 = vmatpush1.bf16.msra.mxu0 %v1810
        %1860 = vmatprep.subr.bf16.mxu0 0
        %1861 = vmatpush1.bf16.msra.mxu0 %v1811
        %1862 = vmatprep.subr.bf16.mxu0 0
        %1863 = vmatpush1.bf16.msra.mxu0 %v1812
        %1864 = vmatprep.subr.bf16.mxu0 0
        %1865 = vmatpush1.bf16.msra.mxu0 %v1813
        %1866 = vmatprep.subr.bf16.mxu0 0
        %1867 = vmatpush1.bf16.msra.mxu0 %v1814
        %1868 = vmatprep.subr.bf16.mxu0 0
        %1869 = vmatpush1.bf16.msra.mxu0 %v1815
        %1870 = vmatprep.subr.bf16.mxu0 0
        %1871 = vmatpush1.bf16.msra.mxu0 %v1816
        %1872 = vmatprep.subr.bf16.mxu0 0
        %1873 = vmatpush1.bf16.msra.mxu0 %v1817
        %1874 = vmatprep.subr.bf16.mxu0 0
        %1875 = vmatpush1.bf16.msra.mxu0 %v1818
        %1876 = vmatprep.subr.bf16.mxu0 0
        %1877 = vmatpush1.bf16.msra.mxu0 %v1819
        %1878 = vmatprep.subr.bf16.mxu0 0
        %1879 = vmatpush1.bf16.msra.mxu0 %v1820
        %1880 = vmatprep.subr.bf16.mxu0 0
        %1881 = vmatpush1.bf16.msra.mxu0 %v1821
        %1882 = vmatprep.subr.bf16.mxu0 0
        %1883 = vmatpush1.bf16.msra.mxu0 %v1822
        %1884 = vmatprep.subr.bf16.mxu0 0
        %1885 = vmatpush1.bf16.msra.mxu0 %v1823
        %1886 = vmatprep.subr.bf16.mxu0 0
        %1887 = vmatpush1.bf16.msra.mxu0 %v1824
        %1888 = vmatprep.subr.bf16.mxu0 0
        %1889 = vmatpush1.bf16.msra.mxu0 %v1825
        %1890 = vmatprep.mubr.bf16.mxu0 %v1619
        %1891 = vmatmul.mubr.bf16.gmra.mrb[0].mxu0 %v1618
        %v1892 = vpop.f32.mrb[0].mxu0
        %v1893 = vadd.f32 0.0, %v1892
        %v1894 = vpop.f32.mrb[0].mxu0
        %v1895 = vpop.f32.mrb[0].mxu0
        %v1896 = vadd.f32 0.0, %v1895
        %v1897 = vpop.f32.mrb[0].mxu0
        %1898 = vmatprep.mubr.bf16.mxu0 %v1622
        %1899 = vmatmul.mubr.bf16.gmra.mrb[0].mxu0 %v1621
        %v1900 = vpop.f32.mrb[0].mxu0
        %v1901 = vadd.f32 0.0, %v1900
        %v1902 = vpop.f32.mrb[0].mxu0
        %v1903 = vpop.f32.mrb[0].mxu0
        %v1904 = vadd.f32 0.0, %v1903
        %v1905 = vpop.f32.mrb[0].mxu0
        %1906 = vmatprep.mubr.bf16.mxu0 %v1625
        %1907 = vmatmul.mubr.bf16.gmra.mrb[0].mxu0 %v1624
        %v1908 = vpop.f32.mrb[0].mxu0
        %v1909 = vadd.f32 0.0, %v1908
        %v1910 = vpop.f32.mrb[0].mxu0
        %v1911 = vpop.f32.mrb[0].mxu0
        %v1912 = vadd.f32 0.0, %v1911
        %v1913 = vpop.f32.mrb[0].mxu0
        %1914 = vmatprep.mubr.bf16.mxu0 %v1628
        %1915 = vmatmul.mubr.bf16.gmra.mrb[0].mxu0 %v1627
        %v1916 = vpop.f32.mrb[0].mxu0
        %v1917 = vadd.f32 0.0, %v1916
        %v1918 = vpop.f32.mrb[0].mxu0
        %v1919 = vpop.f32.mrb[0].mxu0
        %v1920 = vadd.f32 0.0, %v1919
        %v1921 = vpop.f32.mrb[0].mxu0
        %1922 = vmatprep.mubr.bf16.mxu0 %v1631
        %1923 = vmatmul.mubr.bf16.gmra.mrb[0].mxu0 %v1630
        %v1924 = vpop.f32.mrb[0].mxu0
        %v1925 = vadd.f32 0.0, %v1924
        %v1926 = vpop.f32.mrb[0].mxu0
        %v1927 = vpop.f32.mrb[0].mxu0
        %v1928 = vadd.f32 0.0, %v1927
        %v1929 = vpop.f32.mrb[0].mxu0
        %1930 = vmatprep.mubr.bf16.mxu0 %v1634
        %1931 = vmatmul.mubr.bf16.gmra.mrb[0].mxu0 %v1633
        %v1932 = vpop.f32.mrb[0].mxu0
        %v1933 = vadd.f32 0.0, %v1932
        %v1934 = vpop.f32.mrb[0].mxu0
        %v1935 = vpop.f32.mrb[0].mxu0
        %v1936 = vadd.f32 0.0, %v1935
        %v1937 = vpop.f32.mrb[0].mxu0
        %1938 = vmatprep.mubr.bf16.mxu0 %v1637
        %1939 = vmatmul.mubr.bf16.gmra.mrb[0].mxu0 %v1636
        %v1940 = vpop.f32.mrb[0].mxu0
        %v1941 = vadd.f32 0.0, %v1940
        %v1942 = vpop.f32.mrb[0].mxu0
        %v1943 = vpop.f32.mrb[0].mxu0
        %v1944 = vadd.f32 0.0, %v1943
        %v1945 = vpop.f32.mrb[0].mxu0
        %1946 = vmatprep.mubr.bf16.mxu0 %v1640
        %1947 = vmatmul.mubr.bf16.gmra.mrb[0].mxu0 %v1639
        %v1948 = vpop.f32.mrb[0].mxu0
        %v1949 = vadd.f32 0.0, %v1948
        %v1950 = vpop.f32.mrb[0].mxu0
        %v1951 = vpop.f32.mrb[0].mxu0
        %v1952 = vadd.f32 0.0, %v1951
        %v1953 = vpop.f32.mrb[0].mxu0
        %1954 = vmatprep.mubr.bf16.mxu0 %v1643
        %1955 = vmatmul.mubr.bf16.gmra.mrb[0].mxu0 %v1642
        %v1956 = vpop.f32.mrb[0].mxu0
        %v1957 = vadd.f32 0.0, %v1956
        %v1958 = vpop.f32.mrb[0].mxu0
        %v1959 = vpop.f32.mrb[0].mxu0
        %v1960 = vadd.f32 0.0, %v1959
        %v1961 = vpop.f32.mrb[0].mxu0
        %1962 = vmatprep.mubr.bf16.mxu0 %v1646
        %1963 = vmatmul.mubr.bf16.gmra.mrb[0].mxu0 %v1645
        %v1964 = vpop.f32.mrb[0].mxu0
        %v1965 = vadd.f32 0.0, %v1964
        %v1966 = vpop.f32.mrb[0].mxu0
        %v1967 = vpop.f32.mrb[0].mxu0
        %v1968 = vadd.f32 0.0, %v1967
        %v1969 = vpop.f32.mrb[0].mxu0
        %1970 = vmatprep.mubr.bf16.mxu0 %v1649
        %1971 = vmatmul.mubr.bf16.gmra.mrb[0].mxu0 %v1648
        %v1972 = vpop.f32.mrb[0].mxu0
        %v1973 = vadd.f32 0.0, %v1972
        %v1974 = vpop.f32.mrb[0].mxu0
        %v1975 = vpop.f32.mrb[0].mxu0
        %v1976 = vadd.f32 0.0, %v1975
        %v1977 = vpop.f32.mrb[0].mxu0
        %1978 = vmatprep.mubr.bf16.mxu0 %v1652
        %1979 = vmatmul.mubr.bf16.gmra.mrb[0].mxu0 %v1651
        %v1980 = vpop.f32.mrb[0].mxu0
        %v1981 = vadd.f32 0.0, %v1980
        %v1982 = vpop.f32.mrb[0].mxu0
        %v1983 = vpop.f32.mrb[0].mxu0
        %v1984 = vadd.f32 0.0, %v1983
        %v1985 = vpop.f32.mrb[0].mxu0
        %1986 = vmatprep.mubr.bf16.mxu0 %v1655
        %1987 = vmatmul.mubr.bf16.gmra.mrb[0].mxu0 %v1654
        %v1988 = vpop.f32.mrb[0].mxu0
        %v1989 = vadd.f32 0.0, %v1988
        %v1990 = vpop.f32.mrb[0].mxu0
        %v1991 = vpop.f32.mrb[0].mxu0
        %v1992 = vadd.f32 0.0, %v1991
        %v1993 = vpop.f32.mrb[0].mxu0
        %1994 = vmatprep.mubr.bf16.mxu0 %v1658
        %1995 = vmatmul.mubr.bf16.gmra.mrb[0].mxu0 %v1657
        %v1996 = vpop.f32.mrb[0].mxu0
        %v1997 = vadd.f32 0.0, %v1996
        %v1998 = vpop.f32.mrb[0].mxu0
        %v1999 = vpop.f32.mrb[0].mxu0
        %v2000 = vadd.f32 0.0, %v1999
        %v2001 = vpop.f32.mrb[0].mxu0
        %2002 = vmatprep.mubr.bf16.mxu0 %v1661
        %2003 = vmatmul.mubr.bf16.gmra.mrb[0].mxu0 %v1660
        %v2004 = vpop.f32.mrb[0].mxu0
        %v2005 = vadd.f32 0.0, %v2004
        %v2006 = vpop.f32.mrb[0].mxu0
        %v2007 = vpop.f32.mrb[0].mxu0
        %v2008 = vadd.f32 0.0, %v2007
        %v2009 = vpop.f32.mrb[0].mxu0
        %2010 = vmatprep.mubr.bf16.mxu0 %v1664
        %2011 = vmatmul.mubr.bf16.gmra.mrb[0].mxu0 %v1663
        %v2012 = vpop.f32.mrb[0].mxu0
        %v2013 = vadd.f32 0.0, %v2012
        %v2014 = vpop.f32.mrb[0].mxu0
        %v2015 = vpop.f32.mrb[0].mxu0
        %v2016 = vadd.f32 0.0, %v2015
        %v2017 = vpop.f32.mrb[0].mxu0
        %2018 = vdwg.mxu0
        %2019 = vmatprep.subr.bf16.mxu0 0
        %2020 = vmatpush1.bf16.msra.mxu0 %v1826
        %2021 = vmatprep.subr.bf16.mxu0 0
        %2022 = vmatpush1.bf16.msra.mxu0 %v1827
        %2023 = vmatprep.subr.bf16.mxu0 0
        %2024 = vmatpush1.bf16.msra.mxu0 %v1828
        %2025 = vmatprep.subr.bf16.mxu0 0
        %2026 = vmatpush1.bf16.msra.mxu0 %v1829
        %2027 = vmatprep.subr.bf16.mxu0 0
        %2028 = vmatpush1.bf16.msra.mxu0 %v1830
        %2029 = vmatprep.subr.bf16.mxu0 0
        %2030 = vmatpush1.bf16.msra.mxu0 %v1831
        %2031 = vmatprep.subr.bf16.mxu0 0
        %2032 = vmatpush1.bf16.msra.mxu0 %v1832
        %2033 = vmatprep.subr.bf16.mxu0 0
        %2034 = vmatpush1.bf16.msra.mxu0 %v1833
        %2035 = vmatprep.subr.bf16.mxu0 0
        %2036 = vmatpush1.bf16.msra.mxu0 0
        %2037 = vmatprep.subr.bf16.mxu0 0
        %2038 = vmatpush1.bf16.msra.mxu0 0
        %2039 = vmatprep.subr.bf16.mxu0 0
        %2040 = vmatpush1.bf16.msra.mxu0 0
        %2041 = vmatprep.subr.bf16.mxu0 0
        %2042 = vmatpush1.bf16.msra.mxu0 0
        %2043 = vmatprep.subr.bf16.mxu0 0
        %2044 = vmatpush1.bf16.msra.mxu0 0
        %2045 = vmatprep.subr.bf16.mxu0 0
        %2046 = vmatpush1.bf16.msra.mxu0 0
        %2047 = vmatprep.subr.bf16.mxu0 0
        %2048 = vmatpush1.bf16.msra.mxu0 0
        %2049 = vmatprep.subr.bf16.mxu0 0
        %2050 = vmatpush1.bf16.msra.mxu0 0
        %2051 = vmatprep.mubr.bf16.mxu0 0
        %2052 = vmatmul.mubr.bf16.gmra.mrb[0].mxu0 %v1620
        %v2053 = vpop.f32.mrb[0].mxu0
        %v2054 = vadd.f32 %v1893, %v2053
        %v2055 = vpop.f32.mrb[0].mxu0
        %v2056 = vpop.f32.mrb[0].mxu0
        %v2057 = vadd.f32 %v1896, %v2056
        %v2058 = vpop.f32.mrb[0].mxu0
        %2059 = vmatprep.mubr.bf16.mxu0 0
        %2060 = vmatmul.mubr.bf16.gmra.mrb[0].mxu0 %v1623
        %v2061 = vpop.f32.mrb[0].mxu0
        %v2062 = vadd.f32 %v1901, %v2061
        %v2063 = vpop.f32.mrb[0].mxu0
        %v2064 = vpop.f32.mrb[0].mxu0
        %v2065 = vadd.f32 %v1904, %v2064
        %v2066 = vpop.f32.mrb[0].mxu0
        %2067 = vmatprep.mubr.bf16.mxu0 0
        %2068 = vmatmul.mubr.bf16.gmra.mrb[0].mxu0 %v1626
        %v2069 = vpop.f32.mrb[0].mxu0
        %v2070 = vadd.f32 %v1909, %v2069
        %v2071 = vpop.f32.mrb[0].mxu0
        %v2072 = vpop.f32.mrb[0].mxu0
        %v2073 = vadd.f32 %v1912, %v2072
        %v2074 = vpop.f32.mrb[0].mxu0
        %2075 = vmatprep.mubr.bf16.mxu0 0
        %2076 = vmatmul.mubr.bf16.gmra.mrb[0].mxu0 %v1629
        %v2077 = vpop.f32.mrb[0].mxu0
        %v2078 = vadd.f32 %v1917, %v2077
        %v2079 = vpop.f32.mrb[0].mxu0
        %v2080 = vpop.f32.mrb[0].mxu0
        %v2081 = vadd.f32 %v1920, %v2080
        %v2082 = vpop.f32.mrb[0].mxu0
        %2083 = vmatprep.mubr.bf16.mxu0 0
        %2084 = vmatmul.mubr.bf16.gmra.mrb[0].mxu0 %v1632
        %v2085 = vpop.f32.mrb[0].mxu0
        %v2086 = vadd.f32 %v1925, %v2085
        %v2087 = vpop.f32.mrb[0].mxu0
        %v2088 = vpop.f32.mrb[0].mxu0
        %v2089 = vadd.f32 %v1928, %v2088
        %v2090 = vpop.f32.mrb[0].mxu0
        %2091 = vmatprep.mubr.bf16.mxu0 0
        %2092 = vmatmul.mubr.bf16.gmra.mrb[0].mxu0 %v1635
        %v2093 = vpop.f32.mrb[0].mxu0
        %v2094 = vadd.f32 %v1933, %v2093
        %v2095 = vpop.f32.mrb[0].mxu0
        %v2096 = vpop.f32.mrb[0].mxu0
        %v2097 = vadd.f32 %v1936, %v2096
        %v2098 = vpop.f32.mrb[0].mxu0
        %2099 = vmatprep.mubr.bf16.mxu0 0
        %2100 = vmatmul.mubr.bf16.gmra.mrb[0].mxu0 %v1638
        %v2101 = vpop.f32.mrb[0].mxu0
        %v2102 = vadd.f32 %v1941, %v2101
        %v2103 = vpop.f32.mrb[0].mxu0
        %v2104 = vpop.f32.mrb[0].mxu0
        %v2105 = vadd.f32 %v1944, %v2104
        %v2106 = vpop.f32.mrb[0].mxu0
        %2107 = vmatprep.mubr.bf16.mxu0 0
        %2108 = vmatmul.mubr.bf16.gmra.mrb[0].mxu0 %v1641
        %v2109 = vpop.f32.mrb[0].mxu0
        %v2110 = vadd.f32 %v1949, %v2109
        %v2111 = vpop.f32.mrb[0].mxu0
        %v2112 = vpop.f32.mrb[0].mxu0
        %v2113 = vadd.f32 %v1952, %v2112
        %v2114 = vpop.f32.mrb[0].mxu0
        %2115 = vmatprep.mubr.bf16.mxu0 0
        %2116 = vmatmul.mubr.bf16.gmra.mrb[0].mxu0 %v1644
        %v2117 = vpop.f32.mrb[0].mxu0
        %v2118 = vadd.f32 %v1957, %v2117
        %v2119 = vpop.f32.mrb[0].mxu0
        %v2120 = vpop.f32.mrb[0].mxu0
        %v2121 = vadd.f32 %v1960, %v2120
        %v2122 = vpop.f32.mrb[0].mxu0
        %2123 = vmatprep.mubr.bf16.mxu0 0
        %2124 = vmatmul.mubr.bf16.gmra.mrb[0].mxu0 %v1647
        %v2125 = vpop.f32.mrb[0].mxu0
        %v2126 = vadd.f32 %v1965, %v2125
        %v2127 = vpop.f32.mrb[0].mxu0
        %v2128 = vpop.f32.mrb[0].mxu0
        %v2129 = vadd.f32 %v1968, %v2128
        %v2130 = vpop.f32.mrb[0].mxu0
        %2131 = vmatprep.mubr.bf16.mxu0 0
        %2132 = vmatmul.mubr.bf16.gmra.mrb[0].mxu0 %v1650
        %v2133 = vpop.f32.mrb[0].mxu0
        %v2134 = vadd.f32 %v1973, %v2133
        %v2135 = vpop.f32.mrb[0].mxu0
        %v2136 = vpop.f32.mrb[0].mxu0
        %v2137 = vadd.f32 %v1976, %v2136
        %v2138 = vpop.f32.mrb[0].mxu0
        %2139 = vmatprep.mubr.bf16.mxu0 0
        %2140 = vmatmul.mubr.bf16.gmra.mrb[0].mxu0 %v1653
        %v2141 = vpop.f32.mrb[0].mxu0
        %v2142 = vadd.f32 %v1981, %v2141
        %v2143 = vpop.f32.mrb[0].mxu0
        %v2144 = vpop.f32.mrb[0].mxu0
        %v2145 = vadd.f32 %v1984, %v2144
        %v2146 = vpop.f32.mrb[0].mxu0
        %2147 = vmatprep.mubr.bf16.mxu0 0
        %2148 = vmatmul.mubr.bf16.gmra.mrb[0].mxu0 %v1656
        %v2149 = vpop.f32.mrb[0].mxu0
        %v2150 = vadd.f32 %v1989, %v2149
        %v2151 = vpop.f32.mrb[0].mxu0
        %v2152 = vpop.f32.mrb[0].mxu0
        %v2153 = vadd.f32 %v1992, %v2152
        %v2154 = vpop.f32.mrb[0].mxu0
        %2155 = vmatprep.mubr.bf16.mxu0 0
        %2156 = vmatmul.mubr.bf16.gmra.mrb[0].mxu0 %v1659
        %v2157 = vpop.f32.mrb[0].mxu0
        %v2158 = vadd.f32 %v1997, %v2157
        %v2159 = vpop.f32.mrb[0].mxu0
        %v2160 = vpop.f32.mrb[0].mxu0
        %v2161 = vadd.f32 %v2000, %v2160
        %v2162 = vpop.f32.mrb[0].mxu0
        %2163 = vmatprep.mubr.bf16.mxu0 0
        %2164 = vmatmul.mubr.bf16.gmra.mrb[0].mxu0 %v1662
        %v2165 = vpop.f32.mrb[0].mxu0
        %v2166 = vadd.f32 %v2005, %v2165
        %v2167 = vpop.f32.mrb[0].mxu0
        %v2168 = vpop.f32.mrb[0].mxu0
        %v2169 = vadd.f32 %v2008, %v2168
        %v2170 = vpop.f32.mrb[0].mxu0
        %2171 = vmatprep.mubr.bf16.mxu0 0
        %2172 = vmatmul.mubr.bf16.gmra.mrb[0].mxu0 %v1665
        %v2173 = vpop.f32.mrb[0].mxu0
        %v2174 = vadd.f32 %v2013, %v2173
        %v2175 = vpop.f32.mrb[0].mxu0
        %v2176 = vpop.f32.mrb[0].mxu0
        %v2177 = vadd.f32 %v2016, %v2176
        %v2178 = vpop.f32.mrb[0].mxu0
        %2179 = vdwg.mxu0
        %v2180 = vld [vmem:[%s5] sm:$0x1]
        %v2182 = vlaneseq
        %v2183 = vshrl.u32 %v2182, 7
        %v2184 = vsub.s32 0, %v2183
        %v2185 = vrot.slane %v2180, %v2184
        %v2187 = vmul.f32 %v2054, %v2185
        %v2188 = vmul.f32 %v2057, %v2185
        %v2189 = vmul.f32 %v2062, %v2185
        %v2190 = vmul.f32 %v2065, %v2185
        %v2191 = vmul.f32 %v2070, %v2185
        %v2192 = vmul.f32 %v2073, %v2185
        %v2193 = vmul.f32 %v2078, %v2185
        %v2194 = vmul.f32 %v2081, %v2185
        %v2195 = vmul.f32 %v2086, %v2185
        %v2196 = vmul.f32 %v2089, %v2185
        %v2197 = vmul.f32 %v2094, %v2185
        %v2198 = vmul.f32 %v2097, %v2185
        %v2199 = vmul.f32 %v2102, %v2185
        %v2200 = vmul.f32 %v2105, %v2185
        %v2201 = vmul.f32 %v2110, %v2185
        %v2202 = vmul.f32 %v2113, %v2185
        %v2203 = vmul.f32 %v2118, %v2185
        %v2204 = vmul.f32 %v2121, %v2185
        %v2205 = vmul.f32 %v2126, %v2185
        %v2206 = vmul.f32 %v2129, %v2185
        %v2207 = vmul.f32 %v2134, %v2185
        %v2208 = vmul.f32 %v2137, %v2185
        %v2209 = vmul.f32 %v2142, %v2185
        %v2210 = vmul.f32 %v2145, %v2185
        %v2211 = vmul.f32 %v2150, %v2185
        %v2212 = vmul.f32 %v2153, %v2185
        %v2213 = vmul.f32 %v2158, %v2185
        %v2214 = vmul.f32 %v2161, %v2185
        %v2215 = vmul.f32 %v2166, %v2185
        %v2216 = vmul.f32 %v2169, %v2185
        %v2217 = vmul.f32 %v2174, %v2185
        %v2218 = vmul.f32 %v2177, %v2185
        %v2219 = vld [vmem:[%s6] sm:$0x1]
        %v2221 = vlaneseq
        %v2222 = vshrl.u32 %v2221, 7
        %v2223 = vsub.s32 0, %v2222
        %v2224 = vrot.slane %v2219, %v2223
        %v2226 = vadd.f32 %v2187, %v2224
        %v2227 = vadd.f32 %v2188, %v2224
        %v2228 = vadd.f32 %v2189, %v2224
        %v2229 = vadd.f32 %v2190, %v2224
        %v2230 = vadd.f32 %v2191, %v2224
        %v2231 = vadd.f32 %v2192, %v2224
        %v2232 = vadd.f32 %v2193, %v2224
        %v2233 = vadd.f32 %v2194, %v2224
        %v2234 = vadd.f32 %v2195, %v2224
        %v2235 = vadd.f32 %v2196, %v2224
        %v2236 = vadd.f32 %v2197, %v2224
        %v2237 = vadd.f32 %v2198, %v2224
        %v2238 = vadd.f32 %v2199, %v2224
        %v2239 = vadd.f32 %v2200, %v2224
        %v2240 = vadd.f32 %v2201, %v2224
        %v2241 = vadd.f32 %v2202, %v2224
        %v2242 = vadd.f32 %v2203, %v2224
        %v2243 = vadd.f32 %v2204, %v2224
        %v2244 = vadd.f32 %v2205, %v2224
        %v2245 = vadd.f32 %v2206, %v2224
        %v2246 = vadd.f32 %v2207, %v2224
        %v2247 = vadd.f32 %v2208, %v2224
        %v2248 = vadd.f32 %v2209, %v2224
        %v2249 = vadd.f32 %v2210, %v2224
        %v2250 = vadd.f32 %v2211, %v2224
        %v2251 = vadd.f32 %v2212, %v2224
        %v2252 = vadd.f32 %v2213, %v2224
        %v2253 = vadd.f32 %v2214, %v2224
        %v2254 = vadd.f32 %v2215, %v2224
        %v2255 = vadd.f32 %v2216, %v2224
        %v2256 = vadd.f32 %v2217, %v2224
        %v2257 = vadd.f32 %v2218, %v2224
        %v2258 = vadd.f32 %v2226, %v329
        %v2259 = vadd.f32 %v2227, %v330
        %v2260 = vadd.f32 %v2228, %v331
        %v2261 = vadd.f32 %v2229, %v332
        %v2262 = vadd.f32 %v2230, %v333
        %v2263 = vadd.f32 %v2231, %v334
        %v2264 = vadd.f32 %v2232, %v335
        %v2265 = vadd.f32 %v2233, %v336
        %v2266 = vadd.f32 %v2234, %v337
        %v2267 = vadd.f32 %v2235, %v338
        %v2268 = vadd.f32 %v2236, %v339
        %v2269 = vadd.f32 %v2237, %v340
        %v2270 = vadd.f32 %v2238, %v341
        %v2271 = vadd.f32 %v2239, %v342
        %v2272 = vadd.f32 %v2240, %v343
        %v2273 = vadd.f32 %v2241, %v344
        %v2274 = vadd.f32 %v2242, %v345
        %v2275 = vadd.f32 %v2243, %v346
        %v2276 = vadd.f32 %v2244, %v347
        %v2277 = vadd.f32 %v2245, %v348
        %v2278 = vadd.f32 %v2246, %v349
        %v2279 = vadd.f32 %v2247, %v350
        %v2280 = vadd.f32 %v2248, %v351
        %v2281 = vadd.f32 %v2249, %v352
        %v2282 = vadd.f32 %v2250, %v353
        %v2283 = vadd.f32 %v2251, %v354
        %v2284 = vadd.f32 %v2252, %v355
        %v2285 = vadd.f32 %v2253, %v356
        %v2286 = vadd.f32 %v2254, %v357
        %v2287 = vadd.f32 %v2255, %v358
        %v2288 = vadd.f32 %v2256, %v359
        %v2289 = vadd.f32 %v2257, %v360
        %v2290 = vmax.f32 %v2258, 0.0
        %v2291 = vmax.f32 %v2259, 0.0
        %v2292 = vmax.f32 %v2260, 0.0
        %v2293 = vmax.f32 %v2261, 0.0
        %v2294 = vmax.f32 %v2262, 0.0
        %v2295 = vmax.f32 %v2263, 0.0
        %v2296 = vmax.f32 %v2264, 0.0
        %v2297 = vmax.f32 %v2265, 0.0
        %v2298 = vmax.f32 %v2266, 0.0
        %v2299 = vmax.f32 %v2267, 0.0
        %v2300 = vmax.f32 %v2268, 0.0
        %v2301 = vmax.f32 %v2269, 0.0
        %v2302 = vmax.f32 %v2270, 0.0
        %v2303 = vmax.f32 %v2271, 0.0
        %v2304 = vmax.f32 %v2272, 0.0
        %v2305 = vmax.f32 %v2273, 0.0
        %v2306 = vmax.f32 %v2274, 0.0
        %v2307 = vmax.f32 %v2275, 0.0
        %v2308 = vmax.f32 %v2276, 0.0
        %v2309 = vmax.f32 %v2277, 0.0
        %v2310 = vmax.f32 %v2278, 0.0
        %v2311 = vmax.f32 %v2279, 0.0
        %v2312 = vmax.f32 %v2280, 0.0
        %v2313 = vmax.f32 %v2281, 0.0
        %v2314 = vmax.f32 %v2282, 0.0
        %v2315 = vmax.f32 %v2283, 0.0
        %v2316 = vmax.f32 %v2284, 0.0
        %v2317 = vmax.f32 %v2285, 0.0
        %v2318 = vmax.f32 %v2286, 0.0
        %v2319 = vmax.f32 %v2287, 0.0
        %v2320 = vmax.f32 %v2288, 0.0
        %v2321 = vmax.f32 %v2289, 0.0
        %2322 = vst [vmem:[%s325] sm:$0xff] %v2290
        %2323 = vst [vmem:[%s325 + $0x8] sm:$0xff] %v2291
        %2324 = vst [vmem:[%s325 + $0x10] sm:$0xff] %v2292
        %2325 = vst [vmem:[%s325 + $0x18] sm:$0xff] %v2293
        %2326 = vst [vmem:[%s325 + $0x20] sm:$0xff] %v2294
        %2327 = vst [vmem:[%s325 + $0x28] sm:$0xff] %v2295
        %2328 = vst [vmem:[%s325 + $0x30] sm:$0xff] %v2296
        %2329 = vst [vmem:[%s325 + $0x38] sm:$0xff] %v2297
        %2330 = vst [vmem:[%s325 + $0x40] sm:$0xff] %v2298
        %2331 = vst [vmem:[%s325 + $0x48] sm:$0xff] %v2299
        %2332 = vst [vmem:[%s325 + $0x50] sm:$0xff] %v2300
        %2333 = vst [vmem:[%s325 + $0x58] sm:$0xff] %v2301
        %2334 = vst [vmem:[%s325 + $0x60] sm:$0xff] %v2302
        %2335 = vst [vmem:[%s325 + $0x68] sm:$0xff] %v2303
        %2336 = vst [vmem:[%s325 + $0x70] sm:$0xff] %v2304
        %2337 = vst [vmem:[%s325 + $0x78] sm:$0xff] %v2305
        %2338 = vst [vmem:[%s325 + $0x80] sm:$0xff] %v2306
        %2339 = vst [vmem:[%s325 + $0x88] sm:$0xff] %v2307
        %2340 = vst [vmem:[%s325 + $0x90] sm:$0xff] %v2308
        %2341 = vst [vmem:[%s325 + $0x98] sm:$0xff] %v2309
        %2342 = vst [vmem:[%s325 + $0xa0] sm:$0xff] %v2310
        %2343 = vst [vmem:[%s325 + $0xa8] sm:$0xff] %v2311
        %2344 = vst [vmem:[%s325 + $0xb0] sm:$0xff] %v2312
        %2345 = vst [vmem:[%s325 + $0xb8] sm:$0xff] %v2313
        %2346 = vst [vmem:[%s325 + $0xc0] sm:$0xff] %v2314
        %2347 = vst [vmem:[%s325 + $0xc8] sm:$0xff] %v2315
        %2348 = vst [vmem:[%s325 + $0xd0] sm:$0xff] %v2316
        %2349 = vst [vmem:[%s325 + $0xd8] sm:$0xff] %v2317
        %2350 = vst [vmem:[%s325 + $0xe0] sm:$0xff] %v2318
        %2351 = vst [vmem:[%s325 + $0xe8] sm:$0xff] %v2319
        %2352 = vst [vmem:[%s325 + $0xf0] sm:$0xff] %v2320
        %2353 = vst [vmem:[%s325 + $0xf8] sm:$0xff] %v2321
        %s2354 = sand.u32 %s185, 1
        %s2355 = scalar_lea.sflag [#allocation5], %s2354
        %s2356 = sand.u32 %s185, 1
        %s2357 = smul.addr %s2356, 256
        %s2358 = scalar_lea.vmem [#allocation9], %s2357
        // Predicated region
        $region61: #{tpu_custom_call.1} parent=47 // pred_check
          %p2359 = pneg %p195
        $region62: #{tpu_custom_call.1} parent=47 // pred_check_branch
          %2361 = sbr.rel (%p2359) target = $region64
        $region63: #{tpu_custom_call.1} parent=47 // pred_region
          %s2362 = smul.u32 32, %s25
          %s2364 = ssub.s32 4096, 4096
          %2365 = vsyncadd %s2355, %s2364
          %s2366 = smul.addr %s2362, 128
          %s2367 = scalar_lea.hbm %s7, %s2366
          %s2368 = sshll.u32 %s2358, 4
          %s2369 = int_to_ptr.vmem [resolvable:$true] %s2368
          %2374 = dma.vmem_to_hbm [thread:$0]  %s2369, 4096, %s2367, %s2355, 128, 128, 8
        $region64: #{tpu_custom_call.1} parent=47 // pred_fallthru
          _
      $region48: #{tpu_custom_call.1} parent=5 // pred_fallthru
        _
      %p2375 = scmp.le.s32.totalorder 2, %s20
      // Predicated region
      $region65: #{tpu_custom_call.1} parent=5 // pred_check
        %p2376 = pneg %p2375
      $region66: #{tpu_custom_call.1} parent=5 // pred_check_branch
        %2378 = sbr.rel (%p2376) target = $region68
      $region67: #{tpu_custom_call.1} parent=5 // pred_region
        %s2379 = ssub.s32 %s20, 2
        // Predicated region
        $region69: #{tpu_custom_call.1} parent=67 // pred_check
          %p2380 = pneg %p201
        $region70: #{tpu_custom_call.1} parent=67 // pred_check_branch
          %2382 = sbr.rel (%p2380) target = $region72
        $region71: #{tpu_custom_call.1} parent=67 // pred_region
          %s2383 = sand.u32 %s186, 1
          %s2384 = scalar_lea.sflag [#allocation5], %s2383
          %s2385 = sand.u32 %s186, 1
          %s2386 = smul.addr %s2385, 256
          %s2387 = scalar_lea.vmem [#allocation9], %s2386
          %2388 = dma.done %s2384, 4096
        $region72: #{tpu_custom_call.1} parent=67 // pred_fallthru
          _
      $region68: #{tpu_custom_call.1} parent=5 // pred_fallthru
        _
    $region6: #{tpu_custom_call.1} parent=1 // loop_footer
      %s24 = sadd.s32 1, %s20
    $region7: #{tpu_custom_call.1} parent=1 // loop_footer_branch
      %19 = sbr.rel target = $region3
    $region8: #{tpu_custom_call.1} parent=1 // loop_exit
      _
    %2389 = vsyncpa [#allocation4], 1
    %s2390 = scalar_lea.sflag [#allocation4], 1
    %2391 = vsyncpa %s2390, 1
    %2392 = vsyncpa [#allocation7], 1
    %2393 = vsyncpa [#allocation5], 1
    %s2394 = scalar_lea.sflag [#allocation5], 1
    %2395 = vsyncpa %s2394, 1

</llo_original>
